<compile_context>
chip_gen: v7x
topology: tpu7x:2x2x1
jax: 0.10.0
libtpu: 0.0.40
codegen_flags: <defaults>
</compile_context>

<pallas_src>
import functools

import jax
import jax.numpy as jnp
from jax import lax
from jax.experimental import pallas as pl
from jax.experimental.pallas import tpu as pltpu

HEAD_WIDTH = 128        # fused (policy + value-hidden) lane width (one full vreg row)
VALUE_HIDDEN_OFF = 64   # value-head hidden units live in lanes [64, 128)


def alphazero_kernel(x_ref,
                     w1_ref, b1_ref,
                     w2_ref, b2_ref,
                     w3_ref, b3_ref,
                     wh_ref, bh_ref,          # fused heads: [256,128], [1,128]
                     wv2_ref, bv2_ref,        # wv2 as a [1,128] row (lanes 64..127), bv2 [1,1]
                     out_ref,
                     *, num_actions):
    x = x_ref[...]

    # trunk: 3 x (Linear + ReLU)
    h = jnp.maximum(jnp.dot(x, w1_ref[...], preferred_element_type=jnp.float32) + b1_ref[...], 0.0)
    h = jnp.maximum(jnp.dot(h, w2_ref[...], preferred_element_type=jnp.float32) + b2_ref[...], 0.0)
    h = jnp.maximum(jnp.dot(h, w3_ref[...], preferred_element_type=jnp.float32) + b3_ref[...], 0.0)

    # fused heads: one lane-dense [256,128] GEMM
    #   lanes [0, num_actions)      -> policy logits  (h @ wp + bp)
    #   lanes [64, 128)             -> value hidden   (h @ wv1 + bv1)
    heads = jnp.dot(h, wh_ref[...], preferred_element_type=jnp.float32) + bh_ref[...]

    lane = lax.broadcasted_iota(jnp.int32, heads.shape, 1)

    # policy softmax, temperature = 1.0, NO max-subtraction (matches the module's softmax)
    e = jnp.exp(jnp.where(lane < num_actions, heads, -jnp.inf))   # exp(-inf) == 0 in padded lanes
    p = e * pl.reciprocal(jnp.sum(e, axis=-1, keepdims=True))      # exact reciprocal (1e-5 check)

    # value head: ReLU on the value lanes, then VPU multiply + lane-reduce against wv2.
    # wv2_ref is zero outside lanes [64,128), so no extra masking is needed.
    v = jnp.sum(jnp.maximum(heads, 0.0) * wv2_ref[...], axis=-1, keepdims=True) + bv2_ref[...]

    # lane-dense output: policy probs in lanes [0,NA), value in lane NA, zeros elsewhere
    out_ref[...] = p + jnp.where(lane == num_actions, v, 0.0)


def prepare_kernel_params(params, num_actions):
    """Fuse the two head matmuls into one lane-dense [256,128] GEMM (done once, host side)."""
    assert num_actions <= VALUE_HIDDEN_OFF, "fused head layout assumes num_actions <= 64"
    d_model = params["wp"].shape[0]           # 256
    v_hidden = params["wv1"].shape[1]         # 64

    wh = jnp.zeros((d_model, HEAD_WIDTH), jnp.float32)
    wh = wh.at[:, :num_actions].set(params["wp"])
    wh = wh.at[:, VALUE_HIDDEN_OFF:VALUE_HIDDEN_OFF + v_hidden].set(params["wv1"])

    bh = jnp.zeros((1, HEAD_WIDTH), jnp.float32)
    bh = bh.at[:, :num_actions].set(params["bp"])
    bh = bh.at[:, VALUE_HIDDEN_OFF:VALUE_HIDDEN_OFF + v_hidden].set(params["bv1"])

    wv2_row = jnp.zeros((1, HEAD_WIDTH), jnp.float32)
    wv2_row = wv2_row.at[:, VALUE_HIDDEN_OFF:VALUE_HIDDEN_OFF + v_hidden].set(params["wv2"][:, 0])

    return {
        "w1": params["w1"], "b1": params["b1"],
        "w2": params["w2"], "b2": params["b2"],
        "w3": params["w3"], "b3": params["b3"],
        "wh": wh, "bh": bh,
        "wv2_row": wv2_row,
        "bv2": params["bv2"].reshape(1, 1),
    }


@functools.partial(jax.jit, static_argnames=("num_actions", "batch_tile"))
def alphazero_forward(x, kp, *, num_actions, batch_tile=128):
    """x: [B, n_obs] float32. kp: output of prepare_kernel_params. Returns (p [B,NA], v [B,1])."""
    B, n_obs = x.shape
    B_pad = pl.cdiv(B, batch_tile) * batch_tile
    if B_pad != B:
        x = jnp.pad(x, ((0, B_pad - B), (0, 0)))

    def resident(shape):
        # full-array block whose index never changes -> DMA'd once, stays in VMEM for all steps
        nd = len(shape)
        return pl.BlockSpec(shape, lambda i, _nd=nd: (0,) * _nd)

    in_specs = [
        pl.BlockSpec((batch_tile, n_obs), lambda i: (i, 0)),   # batch-tiled input
        resident(kp["w1"].shape), resident(kp["b1"].shape),
        resident(kp["w2"].shape), resident(kp["b2"].shape),
        resident(kp["w3"].shape), resident(kp["b3"].shape),
        resident(kp["wh"].shape), resident(kp["bh"].shape),
        resident(kp["wv2_row"].shape), resident(kp["bv2"].shape),
    ]

    out = pl.pallas_call(
        functools.partial(alphazero_kernel, num_actions=num_actions),
        out_shape=jax.ShapeDtypeStruct((B_pad, HEAD_WIDTH), jnp.float32),
        grid=(B_pad // batch_tile,),
        in_specs=in_specs,
        out_specs=pl.BlockSpec((batch_tile, HEAD_WIDTH), lambda i: (i, 0)),
        compiler_params=pltpu.CompilerParams(dimension_semantics=("parallel",)),
    )(x,
      kp["w1"], kp["b1"], kp["w2"], kp["b2"], kp["w3"], kp["b3"],
      kp["wh"], kp["bh"], kp["wv2_row"], kp["bv2"])

    p = out[:B, :num_actions]
    v = out[:B, num_actions:num_actions + 1]
    return p, v


def init_params(key, n_obs, num_actions):
    """Deterministic PyTorch-default-style init (U(-1/sqrt(fan_in), 1/sqrt(fan_in)))."""
    dims = [
        ("w1", "b1", n_obs, 128),
        ("w2", "b2", 128, 256),
        ("w3", "b3", 256, 256),
        ("wp", "bp", 256, num_actions),
        ("wv1", "bv1", 256, 64),
        ("wv2", "bv2", 64, 1),
    ]
    params = {}
    for wname, bname, fan_in, fan_out in dims:
        key, kw, kb = jax.random.split(key, 3)
        bound = 1.0 / (fan_in ** 0.5)
        # stored as [in, out]  (transpose of PyTorch's [out, in])
        params[wname] = jax.random.uniform(kw, (fan_in, fan_out), jnp.float32,
                                           minval=-bound, maxval=bound)
        params[bname] = jax.random.uniform(kb, (1, fan_out), jnp.float32,
                                           minval=-bound, maxval=bound)
    return params


def reference_forward(x, params):
    """Pure-JAX reference of the PyTorch forward (uses the original, unfused params)."""
    h = jnp.maximum(x @ params["w1"] + params["b1"], 0.0)
    h = jnp.maximum(h @ params["w2"] + params["b2"], 0.0)
    h = jnp.maximum(h @ params["w3"] + params["b3"], 0.0)
    logits = h @ params["wp"] + params["bp"]
    e = jnp.exp(logits)
    p = e / jnp.sum(e, axis=-1, keepdims=True)
    v = jnp.maximum(h @ params["wv1"] + params["bv1"], 0.0)
    v = v @ params["wv2"] + params["bv2"]
    return p, v


if __name__ == "__main__":
    key = jax.random.PRNGKey(0)
    key, kx, kparams_key, kx2 = jax.random.split(key, 4)

    B, n_obs, num_actions = 2, 16, 8
    x = jax.random.normal(kx, (B, n_obs), jnp.float32)
    params = init_params(kparams_key, n_obs, num_actions)
    kparams = prepare_kernel_params(params, num_actions)

    # small batch (matches the module's typical tiny-batch usage)
    p, v = alphazero_forward(x, kparams, num_actions=num_actions)
    jax.block_until_ready((p, v))

    p_ref, v_ref = reference_forward(x, params)
    assert p.shape == (B, num_actions) and v.shape == (B, 1)
    assert jnp.allclose(p, p_ref, atol=1e-5, rtol=1e-5)
    assert jnp.allclose(v, v_ref, atol=1e-5, rtol=1e-5)
    assert jnp.allclose(jnp.sum(p, axis=-1), 1.0, atol=1e-5)

    # larger batch -> multi-step grid, weights stay resident across steps
    B2 = 300
    x2 = jax.random.normal(kx2, (B2, n_obs), jnp.float32)
    p2, v2 = alphazero_forward(x2, kparams, num_actions=num_actions)
    jax.block_until_ready((p2, v2))
    p2_ref, v2_ref = reference_forward(x2, params)
    assert p2.shape == (B2, num_actions) and v2.shape == (B2, 1)
    assert jnp.allclose(p2, p2_ref, atol=1e-5, rtol=1e-5)
    assert jnp.allclose(v2, v2_ref, atol=1e-5, rtol=1e-5)

    print("KERNEL_OK")
</pallas_src>

<mosaic_0001>
module attributes {stable_mosaic.version = 11 : i64} {
  func.func @alphazero_kernel(%arg0: i32, %arg1: memref<128x16xf32, #tpu.memory_space<vmem>>, %arg2: memref<16x128xf32, #tpu.memory_space<vmem>>, %arg3: memref<1x128xf32, #tpu.memory_space<vmem>>, %arg4: memref<128x256xf32, #tpu.memory_space<vmem>>, %arg5: memref<1x256xf32, #tpu.memory_space<vmem>>, %arg6: memref<256x256xf32, #tpu.memory_space<vmem>>, %arg7: memref<1x256xf32, #tpu.memory_space<vmem>>, %arg8: memref<256x128xf32, #tpu.memory_space<vmem>>, %arg9: memref<1x128xf32, #tpu.memory_space<vmem>>, %arg10: memref<1x128xf32, #tpu.memory_space<vmem>>, %arg11: memref<1x1xf32, #tpu.memory_space<vmem>>, %arg12: memref<128x128xf32, #tpu.memory_space<vmem>>) attributes {dimension_semantics = [#tpu.dimension_semantics<parallel>], iteration_bounds = array<i64: 1>, scalar_prefetch = 0 : i64, scratch_operands = 0 : i64, tpu.core_type = #tpu.core_type<tc>, window_params = [{transform_indices = @transform_0, window_bounds = array<i64: 128, 16>}, {pipeline_mode = #tpu.pipeline_mode<synchronous>, transform_indices = @transform_1, window_bounds = array<i64: 16, 128>}, {pipeline_mode = #tpu.pipeline_mode<synchronous>, transform_indices = @transform_2, window_bounds = array<i64: 1, 128>}, {pipeline_mode = #tpu.pipeline_mode<synchronous>, transform_indices = @transform_3, window_bounds = array<i64: 128, 256>}, {pipeline_mode = #tpu.pipeline_mode<synchronous>, transform_indices = @transform_4, window_bounds = array<i64: 1, 256>}, {pipeline_mode = #tpu.pipeline_mode<synchronous>, transform_indices = @transform_5, window_bounds = array<i64: 256, 256>}, {pipeline_mode = #tpu.pipeline_mode<synchronous>, transform_indices = @transform_6, window_bounds = array<i64: 1, 256>}, {pipeline_mode = #tpu.pipeline_mode<synchronous>, transform_indices = @transform_7, window_bounds = array<i64: 256, 128>}, {pipeline_mode = #tpu.pipeline_mode<synchronous>, transform_indices = @transform_8, window_bounds = array<i64: 1, 128>}, {pipeline_mode = #tpu.pipeline_mode<synchronous>, transform_indices = @transform_9, window_bounds = array<i64: 1, 128>}, {pipeline_mode = #tpu.pipeline_mode<synchronous>, transform_indices = @transform_10, window_bounds = array<i64: 1, 1>}, {transform_indices = @transform_11, window_bounds = array<i64: 128, 128>}]} {
    %c0 = arith.constant 0 : index
    %c0_0 = arith.constant 0 : index
    %0 = vector.load %arg1[%c0, %c0_0] : memref<128x16xf32, #tpu.memory_space<vmem>>, vector<128x16xf32>
    %c0_1 = arith.constant 0 : index
    %c0_2 = arith.constant 0 : index
    %1 = vector.load %arg2[%c0_1, %c0_2] : memref<16x128xf32, #tpu.memory_space<vmem>>, vector<16x128xf32>
    %cst = arith.constant dense<0.000000e+00> : vector<128x128xf32>
    %2 = tpu.matmul %0, %1, %cst {dimension_numbers = #tpu.dot_dimension_numbers<[1], [0], [0], [1], [0, 0, 1, 1], [], []>} : vector<128x16xf32>, vector<16x128xf32>, vector<128x128xf32> -> vector<128x128xf32>
    %c0_3 = arith.constant 0 : index
    %c0_4 = arith.constant 0 : index
    %3 = vector.load %arg3[%c0_3, %c0_4] : memref<1x128xf32, #tpu.memory_space<vmem>>, vector<1x128xf32>
    %4 = vector.broadcast %3 : vector<1x128xf32> to vector<128x128xf32>
    %5 = arith.addf %2, %4 : vector<128x128xf32>
    %cst_5 = arith.constant 0.000000e+00 : f32
    %6 = vector.broadcast %cst_5 : f32 to vector<128x128xf32>
    %7 = arith.maximumf %5, %6 : vector<128x128xf32>
    %c0_6 = arith.constant 0 : index
    %c0_7 = arith.constant 0 : index
    %8 = vector.load %arg4[%c0_6, %c0_7] : memref<128x256xf32, #tpu.memory_space<vmem>>, vector<128x256xf32>
    %cst_8 = arith.constant dense<0.000000e+00> : vector<128x256xf32>
    %9 = tpu.matmul %7, %8, %cst_8 {dimension_numbers = #tpu.dot_dimension_numbers<[1], [0], [0], [1], [0, 0, 1, 1], [], []>} : vector<128x128xf32>, vector<128x256xf32>, vector<128x256xf32> -> vector<128x256xf32>
    %c0_9 = arith.constant 0 : index
    %c0_10 = arith.constant 0 : index
    %10 = vector.load %arg5[%c0_9, %c0_10] : memref<1x256xf32, #tpu.memory_space<vmem>>, vector<1x256xf32>
    %11 = vector.broadcast %10 : vector<1x256xf32> to vector<128x256xf32>
    %12 = arith.addf %9, %11 : vector<128x256xf32>
    %cst_11 = arith.constant 0.000000e+00 : f32
    %13 = vector.broadcast %cst_11 : f32 to vector<128x256xf32>
    %14 = arith.maximumf %12, %13 : vector<128x256xf32>
    %c0_12 = arith.constant 0 : index
    %c0_13 = arith.constant 0 : index
    %15 = vector.load %arg6[%c0_12, %c0_13] : memref<256x256xf32, #tpu.memory_space<vmem>>, vector<256x256xf32>
    %cst_14 = arith.constant dense<0.000000e+00> : vector<128x256xf32>
    %16 = tpu.matmul %14, %15, %cst_14 {dimension_numbers = #tpu.dot_dimension_numbers<[1], [0], [0], [1], [0, 0, 1, 1], [], []>} : vector<128x256xf32>, vector<256x256xf32>, vector<128x256xf32> -> vector<128x256xf32>
    %c0_15 = arith.constant 0 : index
    %c0_16 = arith.constant 0 : index
    %17 = vector.load %arg7[%c0_15, %c0_16] : memref<1x256xf32, #tpu.memory_space<vmem>>, vector<1x256xf32>
    %18 = vector.broadcast %17 : vector<1x256xf32> to vector<128x256xf32>
    %19 = arith.addf %16, %18 : vector<128x256xf32>
    %cst_17 = arith.constant 0.000000e+00 : f32
    %20 = vector.broadcast %cst_17 : f32 to vector<128x256xf32>
    %21 = arith.maximumf %19, %20 : vector<128x256xf32>
    %c0_18 = arith.constant 0 : index
    %c0_19 = arith.constant 0 : index
    %22 = vector.load %arg8[%c0_18, %c0_19] : memref<256x128xf32, #tpu.memory_space<vmem>>, vector<256x128xf32>
    %cst_20 = arith.constant dense<0.000000e+00> : vector<128x128xf32>
    %23 = tpu.matmul %21, %22, %cst_20 {dimension_numbers = #tpu.dot_dimension_numbers<[1], [0], [0], [1], [0, 0, 1, 1], [], []>} : vector<128x256xf32>, vector<256x128xf32>, vector<128x128xf32> -> vector<128x128xf32>
    %c0_21 = arith.constant 0 : index
    %c0_22 = arith.constant 0 : index
    %24 = vector.load %arg9[%c0_21, %c0_22] : memref<1x128xf32, #tpu.memory_space<vmem>>, vector<1x128xf32>
    %25 = vector.broadcast %24 : vector<1x128xf32> to vector<128x128xf32>
    %26 = arith.addf %23, %25 : vector<128x128xf32>
    %27 = tpu.iota {dimensions = array<i32: 1>} : vector<128x128xi32>
    %c8_i32 = arith.constant 8 : i32
    %28 = vector.broadcast %c8_i32 : i32 to vector<128x128xi32>
    %29 = arith.cmpi slt, %27, %28 : vector<128x128xi32>
    %cst_23 = arith.constant 0xFF800000 : f32
    %30 = vector.broadcast %cst_23 : f32 to vector<128x128xf32>
    %31 = arith.select %29, %26, %30 : vector<128x128xi1>, vector<128x128xf32>
    %32 = math.exp %31 : vector<128x128xf32>
    %cst_24 = arith.constant dense<0.000000e+00> : vector<128xf32>
    %33 = vector.multi_reduction <add>, %32, %cst_24 [1] : vector<128x128xf32> to vector<128xf32>
    %34 = vector.shape_cast %33 : vector<128xf32> to vector<128x1xf32>
    %35 = tpu.reciprocal %34 : vector<128x1xf32> -> vector<128x1xf32>
    %36 = vector.broadcast %35 : vector<128x1xf32> to vector<128x128xf32>
    %37 = arith.mulf %32, %36 : vector<128x128xf32>
    %cst_25 = arith.constant 0.000000e+00 : f32
    %38 = vector.broadcast %cst_25 : f32 to vector<128x128xf32>
    %39 = arith.maximumf %26, %38 : vector<128x128xf32>
    %c0_26 = arith.constant 0 : index
    %c0_27 = arith.constant 0 : index
    %40 = vector.load %arg10[%c0_26, %c0_27] : memref<1x128xf32, #tpu.memory_space<vmem>>, vector<1x128xf32>
    %41 = vector.broadcast %40 : vector<1x128xf32> to vector<128x128xf32>
    %42 = arith.mulf %39, %41 : vector<128x128xf32>
    %cst_28 = arith.constant dense<0.000000e+00> : vector<128xf32>
    %43 = vector.multi_reduction <add>, %42, %cst_28 [1] : vector<128x128xf32> to vector<128xf32>
    %44 = vector.shape_cast %43 : vector<128xf32> to vector<128x1xf32>
    %c0_29 = arith.constant 0 : index
    %c0_30 = arith.constant 0 : index
    %45 = vector.load %arg11[%c0_29, %c0_30] : memref<1x1xf32, #tpu.memory_space<vmem>>, vector<1x1xf32>
    %46 = vector.broadcast %45 : vector<1x1xf32> to vector<128x1xf32>
    %47 = arith.addf %44, %46 : vector<128x1xf32>
    %c8_i32_31 = arith.constant 8 : i32
    %48 = vector.broadcast %c8_i32_31 : i32 to vector<128x128xi32>
    %49 = arith.cmpi eq, %27, %48 : vector<128x128xi32>
    %cst_32 = arith.constant 0.000000e+00 : f32
    %50 = vector.shape_cast %47 : vector<128x1xf32> to vector<128x1xf32>
    %51 = vector.broadcast %50 : vector<128x1xf32> to vector<128x128xf32>
    %52 = vector.broadcast %cst_32 : f32 to vector<128x128xf32>
    %53 = arith.select %49, %51, %52 : vector<128x128xi1>, vector<128x128xf32>
    %54 = arith.addf %37, %53 : vector<128x128xf32>
    %c0_33 = arith.constant 0 : index
    %c0_34 = arith.constant 0 : index
    %55 = vector.load %arg12[%c0_33, %c0_34] : memref<128x128xf32, #tpu.memory_space<vmem>>, vector<128x128xf32>
    tpu.vector_store %arg12[%c0_33, %c0_34], %54 {strides = array<i32>} : memref<128x128xf32, #tpu.memory_space<vmem>>, vector<128x128xf32>,
    return
  }
  func.func @transform_0(%arg0: i32) -> (i32, i32) {
    %c0_i32 = arith.constant 0 : i32
    %c0_i32_0 = arith.constant 0 : i32
    return %arg0, %c0_i32 : i32, i32
  }
  func.func @transform_1(%arg0: i32) -> (i32, i32) {
    %c0_i32 = arith.constant 0 : i32
    %c0_i32_0 = arith.constant 0 : i32
    %c0_i32_1 = arith.constant 0 : i32
    return %c0_i32, %c0_i32_0 : i32, i32
  }
  func.func @transform_2(%arg0: i32) -> (i32, i32) {
    %c0_i32 = arith.constant 0 : i32
    %c0_i32_0 = arith.constant 0 : i32
    %c0_i32_1 = arith.constant 0 : i32
    return %c0_i32, %c0_i32_0 : i32, i32
  }
  func.func @transform_3(%arg0: i32) -> (i32, i32) {
    %c0_i32 = arith.constant 0 : i32
    %c0_i32_0 = arith.constant 0 : i32
    %c0_i32_1 = arith.constant 0 : i32
    return %c0_i32, %c0_i32_0 : i32, i32
  }
  func.func @transform_4(%arg0: i32) -> (i32, i32) {
    %c0_i32 = arith.constant 0 : i32
    %c0_i32_0 = arith.constant 0 : i32
    %c0_i32_1 = arith.constant 0 : i32
    return %c0_i32, %c0_i32_0 : i32, i32
  }
  func.func @transform_5(%arg0: i32) -> (i32, i32) {
    %c0_i32 = arith.constant 0 : i32
    %c0_i32_0 = arith.constant 0 : i32
    %c0_i32_1 = arith.constant 0 : i32
    return %c0_i32, %c0_i32_0 : i32, i32
  }
  func.func @transform_6(%arg0: i32) -> (i32, i32) {
    %c0_i32 = arith.constant 0 : i32
    %c0_i32_0 = arith.constant 0 : i32
    %c0_i32_1 = arith.constant 0 : i32
    return %c0_i32, %c0_i32_0 : i32, i32
  }
  func.func @transform_7(%arg0: i32) -> (i32, i32) {
    %c0_i32 = arith.constant 0 : i32
    %c0_i32_0 = arith.constant 0 : i32
    %c0_i32_1 = arith.constant 0 : i32
    return %c0_i32, %c0_i32_0 : i32, i32
  }
  func.func @transform_8(%arg0: i32) -> (i32, i32) {
    %c0_i32 = arith.constant 0 : i32
    %c0_i32_0 = arith.constant 0 : i32
    %c0_i32_1 = arith.constant 0 : i32
    return %c0_i32, %c0_i32_0 : i32, i32
  }
  func.func @transform_9(%arg0: i32) -> (i32, i32) {
    %c0_i32 = arith.constant 0 : i32
    %c0_i32_0 = arith.constant 0 : i32
    %c0_i32_1 = arith.constant 0 : i32
    return %c0_i32, %c0_i32_0 : i32, i32
  }
  func.func @transform_10(%arg0: i32) -> (i32, i32) {
    %c0_i32 = arith.constant 0 : i32
    %c0_i32_0 = arith.constant 0 : i32
    %c0_i32_1 = arith.constant 0 : i32
    return %c0_i32, %c0_i32_0 : i32, i32
  }
  func.func @transform_11(%arg0: i32) -> (i32, i32) {
    %c0_i32 = arith.constant 0 : i32
    %c0_i32_0 = arith.constant 0 : i32
    return %arg0, %c0_i32 : i32, i32
  }
}

</mosaic_0001>

<llo_original>
// kernel: alphazero_forward.1
$region0: #{alphazero_forward.1}
  #allocation0 [shape = 'u32[]', space=smem, size = 0x4, offset = 0x4, fixed_abs, tag = 'smem constant byte address 0x4 - core index']
  #allocation1 [shape = 'u32[144,128]{1,0:T(1,128)}', space=vmem, size = 0x12000, scoped, tag = 'internal scratch']
  #allocation2 [shape = 'f32[1,1]{1,0:T(1,128)S(1)}', space=vmem, size = 0x200, scoped, tag = 'scoped memory for alphazero_forward.1']
  %s0 = inlined_call_operand.vmem [shape: f32[128,16], index: 0, kind: input, shape index: {}]
  %s1 = inlined_call_operand.vmem [shape: f32[16,128], index: 1, kind: input, shape index: {}]
  %s2 = inlined_call_operand.vmem [shape: f32[1,128], index: 2, kind: input, shape index: {}]
  %s3 = inlined_call_operand.hbm [shape: f32[128,256], index: 3, kind: input, shape index: {}]
  %s4 = inlined_call_operand.vmem [shape: f32[1,256], index: 4, kind: input, shape index: {}]
  %s5 = inlined_call_operand.hbm [shape: f32[256,256], index: 5, kind: input, shape index: {}]
  %s6 = inlined_call_operand.vmem [shape: f32[1,256], index: 6, kind: input, shape index: {}]
  %s7 = inlined_call_operand.hbm [shape: f32[256,128], index: 7, kind: input, shape index: {}]
  %s8 = inlined_call_operand.vmem [shape: f32[1,128], index: 8, kind: input, shape index: {}]
  %s9 = inlined_call_operand.vmem [shape: f32[1,128], index: 9, kind: input, shape index: {}]
  %s10 = inlined_call_operand.<no memory space> [shape: f32[1,1], index: 10, kind: input, shape index: {}]
  %s11 = inlined_call_operand.vmem [shape: f32[128,128], index: 11, kind: output, shape index: {}]
  %s12 = sld [smem:[#allocation0]]
  $region66: #{alphazero_forward.1} parent=0
    _
  %s14 = ssub.s32 1, %s12
  %s15 = scalar_select 0, %s14, %s12
  %v16 = vstv %s10
  %17 = vst [vmem:[#allocation2] sm:$0x1] %v16
  $region1: #{alphazero_forward.1} parent=0
    #allocation3 [shape = 'u8[131072]{0}', space=vmem, size = 0x20000, scoped, tag = 'input window, operand 3, single buffered']
    #allocation4 [shape = 's32[1]{0}', space=sflag, size = 0x4, scoped, tag = 'scoped memory for alphazero_forward.1']
    #allocation5 [shape = 'u8[262144]{0}', space=vmem, size = 0x40000, scoped, tag = 'input window, operand 5, single buffered']
    #allocation6 [shape = 's32[1]{0}', space=sflag, size = 0x4, scoped, tag = 'scoped memory for alphazero_forward.1']
    #allocation7 [shape = 'u8[131072]{0}', space=vmem, size = 0x20000, scoped, tag = 'input window, operand 7, single buffered']
    %18 = vsyncpa [#allocation4], 0
    %19 = vsyncpa [#allocation6], 0
    // Predicated region
    $region2: #{alphazero_forward.1} parent=1 // pred_check
      _
    $region3: #{alphazero_forward.1} parent=1 // pred_check_branch
      %21 = sbr.rel (0) target = $region5
    $region4: #{alphazero_forward.1} parent=1 // pred_region
      _
    $region5: #{alphazero_forward.1} parent=1 // pred_fallthru
      _
    // Predicated region
    $region6: #{alphazero_forward.1} parent=1 // pred_check
      _
    $region7: #{alphazero_forward.1} parent=1 // pred_check_branch
      %23 = sbr.rel (0) target = $region9
    $region8: #{alphazero_forward.1} parent=1 // pred_region
      _
    $region9: #{alphazero_forward.1} parent=1 // pred_fallthru
      _
    // Predicated region
    $region10: #{alphazero_forward.1} parent=1 // pred_check
      _
    $region11: #{alphazero_forward.1} parent=1 // pred_check_branch
      %25 = sbr.rel (0) target = $region13
    $region12: #{alphazero_forward.1} parent=1 // pred_region
      _
    $region13: #{alphazero_forward.1} parent=1 // pred_fallthru
      _
    // Predicated region
    $region14: #{alphazero_forward.1} parent=1 // pred_check
      _
    $region15: #{alphazero_forward.1} parent=1 // pred_check_branch
      %27 = sbr.rel (0) target = $region17
    $region16: #{alphazero_forward.1} parent=1 // pred_region
      %s29 = ssub.s32 4096, 4096
      %30 = vsyncadd [#allocation4], %s29
      %s31 = sshll.u32 [#allocation3], 4
      %s32 = int_to_ptr.vmem [resolvable:$true] %s31
      %37 = dma.hbm_to_vmem [thread:$0]  %s3, 4096, %s32, [#allocation4], 256, 256, 16
    $region17: #{alphazero_forward.1} parent=1 // pred_fallthru
      _
    // Predicated region
    $region18: #{alphazero_forward.1} parent=1 // pred_check
      _
    $region19: #{alphazero_forward.1} parent=1 // pred_check_branch
      %39 = sbr.rel (0) target = $region21
    $region20: #{alphazero_forward.1} parent=1 // pred_region
      _
    $region21: #{alphazero_forward.1} parent=1 // pred_fallthru
      _
    // Predicated region
    $region22: #{alphazero_forward.1} parent=1 // pred_check
      _
    $region23: #{alphazero_forward.1} parent=1 // pred_check_branch
      %41 = sbr.rel (0) target = $region25
    $region24: #{alphazero_forward.1} parent=1 // pred_region
      %s43 = ssub.s32 8192, 8192
      %44 = vsyncadd [#allocation6], %s43
      %s45 = sshll.u32 [#allocation5], 4
      %s46 = int_to_ptr.vmem [resolvable:$true] %s45
      %51 = dma.hbm_to_vmem [thread:$0]  %s5, 8192, %s46, [#allocation6], 256, 256, 16
    $region25: #{alphazero_forward.1} parent=1 // pred_fallthru
      _
    // Predicated region
    $region26: #{alphazero_forward.1} parent=1 // pred_check
      _
    $region27: #{alphazero_forward.1} parent=1 // pred_check_branch
      %53 = sbr.rel (0) target = $region29
    $region28: #{alphazero_forward.1} parent=1 // pred_region
      _
    $region29: #{alphazero_forward.1} parent=1 // pred_fallthru
      _
    // Predicated region
    $region30: #{alphazero_forward.1} parent=1 // pred_check
      _
    $region31: #{alphazero_forward.1} parent=1 // pred_check_branch
      %55 = sbr.rel (0) target = $region33
    $region32: #{alphazero_forward.1} parent=1 // pred_region
      %s57 = ssub.s32 4096, 4096
      %58 = vsyncadd [#allocation6], %s57
      %s59 = sshll.u32 [#allocation7], 4
      %s60 = int_to_ptr.vmem [resolvable:$true] %s59
      %65 = dma.hbm_to_vmem [thread:$0]  %s7, 4096, %s60, [#allocation6], 128, 128, 8
    $region33: #{alphazero_forward.1} parent=1 // pred_fallthru
      _
    // Predicated region
    $region34: #{alphazero_forward.1} parent=1 // pred_check
      _
    $region35: #{alphazero_forward.1} parent=1 // pred_check_branch
      %67 = sbr.rel (0) target = $region37
    $region36: #{alphazero_forward.1} parent=1 // pred_region
      _
    $region37: #{alphazero_forward.1} parent=1 // pred_fallthru
      _
    // Predicated region
    $region38: #{alphazero_forward.1} parent=1 // pred_check
      _
    $region39: #{alphazero_forward.1} parent=1 // pred_check_branch
      %69 = sbr.rel (0) target = $region41
    $region40: #{alphazero_forward.1} parent=1 // pred_region
      _
    $region41: #{alphazero_forward.1} parent=1 // pred_fallthru
      _
    // Predicated region
    $region42: #{alphazero_forward.1} parent=1 // pred_check
      _
    $region43: #{alphazero_forward.1} parent=1 // pred_check_branch
      %71 = sbr.rel (0) target = $region45
    $region44: #{alphazero_forward.1} parent=1 // pred_region
      _
    $region45: #{alphazero_forward.1} parent=1 // pred_fallthru
      _
    // Predicated region
    $region46: #{alphazero_forward.1} parent=1 // pred_check
      _
    $region47: #{alphazero_forward.1} parent=1 // pred_check_branch
      %73 = sbr.rel (0) target = $region49
    $region48: #{alphazero_forward.1} parent=1 // pred_region
      %74 = dma.done [#allocation4], 4096
    $region49: #{alphazero_forward.1} parent=1 // pred_fallthru
      _
    // Predicated region
    $region50: #{alphazero_forward.1} parent=1 // pred_check
      _
    $region51: #{alphazero_forward.1} parent=1 // pred_check_branch
      %76 = sbr.rel (0) target = $region53
    $region52: #{alphazero_forward.1} parent=1 // pred_region
      %77 = dma.done [#allocation6], 8192
    $region53: #{alphazero_forward.1} parent=1 // pred_fallthru
      _
    // Predicated region
    $region54: #{alphazero_forward.1} parent=1 // pred_check
      _
    $region55: #{alphazero_forward.1} parent=1 // pred_check_branch
      %79 = sbr.rel (0) target = $region57
    $region56: #{alphazero_forward.1} parent=1 // pred_region
      %80 = dma.done [#allocation6], 4096
    $region57: #{alphazero_forward.1} parent=1 // pred_fallthru
      _
    %v81 = vld [vmem:[%s0] sm:$0xff]
    %v82 = vld [vmem:[%s0 + $0x8] sm:$0xff]
    %v83 = vld [vmem:[%s0 + $0x10] sm:$0xff]
    %v84 = vld [vmem:[%s0 + $0x18] sm:$0xff]
    %v85 = vld [vmem:[%s0 + $0x20] sm:$0xff]
    %v86 = vld [vmem:[%s0 + $0x28] sm:$0xff]
    %v87 = vld [vmem:[%s0 + $0x30] sm:$0xff]
    %v88 = vld [vmem:[%s0 + $0x38] sm:$0xff]
    %v89 = vld [vmem:[%s0 + $0x40] sm:$0xff]
    %v90 = vld [vmem:[%s0 + $0x48] sm:$0xff]
    %v91 = vld [vmem:[%s0 + $0x50] sm:$0xff]
    %v92 = vld [vmem:[%s0 + $0x58] sm:$0xff]
    %v93 = vld [vmem:[%s0 + $0x60] sm:$0xff]
    %v94 = vld [vmem:[%s0 + $0x68] sm:$0xff]
    %v95 = vld [vmem:[%s0 + $0x70] sm:$0xff]
    %v96 = vld [vmem:[%s0 + $0x78] sm:$0xff]
    %v97 = vld [vmem:[%s1] sm:$0xff]
    %v98 = vld [vmem:[%s1 + $0x8] sm:$0xff]
    %v99 = vld [vmem:[%s2] sm:$0x1]
    %v101 = vlaneseq
    %v102 = vshrl.u32 %v101, 7
    %v103 = vsub.s32 0, %v102
    %v104 = vrot.slane %v99, %v103
    %vm106 = vcmask 130048
    %v108 = vsel %vm106, %v81, 0
    %v111 = vsel %vm106, %v82, 0
    %v114 = vsel %vm106, %v83, 0
    %v117 = vsel %vm106, %v84, 0
    %v120 = vsel %vm106, %v85, 0
    %v123 = vsel %vm106, %v86, 0
    %v126 = vsel %vm106, %v87, 0
    %v129 = vsel %vm106, %v88, 0
    %v132 = vsel %vm106, %v89, 0
    %v135 = vsel %vm106, %v90, 0
    %v138 = vsel %vm106, %v91, 0
    %v141 = vsel %vm106, %v92, 0
    %v144 = vsel %vm106, %v93, 0
    %v147 = vsel %vm106, %v94, 0
    %v150 = vsel %vm106, %v95, 0
    %v153 = vsel %vm106, %v96, 0
    %155 = vmatprep.subr.mxu0 0.0
    %156 = vmatpush1.msra.mxu0 %v97
    %157 = vmatprep.subr.mxu0 0.0
    %158 = vmatpush1.msra.mxu0 %v98
    %159 = vmatprep.subr.mxu0 0.0
    %160 = vmatpush1.msra.mxu0 0.0
    %161 = vmatprep.subr.mxu0 0.0
    %162 = vmatpush1.msra.mxu0 0.0
    %163 = vmatprep.subr.mxu0 0.0
    %164 = vmatpush1.msra.mxu0 0.0
    %165 = vmatprep.subr.mxu0 0.0
    %166 = vmatpush1.msra.mxu0 0.0
    %167 = vmatprep.subr.mxu0 0.0
    %168 = vmatpush1.msra.mxu0 0.0
    %169 = vmatprep.subr.mxu0 0.0
    %170 = vmatpush1.msra.mxu0 0.0
    %171 = vmatprep.subr.mxu0 0.0
    %172 = vmatpush1.msra.mxu0 0.0
    %173 = vmatprep.subr.mxu0 0.0
    %174 = vmatpush1.msra.mxu0 0.0
    %175 = vmatprep.subr.mxu0 0.0
    %176 = vmatpush1.msra.mxu0 0.0
    %177 = vmatprep.subr.mxu0 0.0
    %178 = vmatpush1.msra.mxu0 0.0
    %179 = vmatprep.subr.mxu0 0.0
    %180 = vmatpush1.msra.mxu0 0.0
    %181 = vmatprep.subr.mxu0 0.0
    %182 = vmatpush1.msra.mxu0 0.0
    %183 = vmatprep.subr.mxu0 0.0
    %184 = vmatpush1.msra.mxu0 0.0
    %185 = vmatprep.subr.mxu0 0.0
    %186 = vmatpush1.msra.mxu0 0.0
    %187 = vmatprep.subr.mxu0 0.0
    %188 = vmatpush1.msra.mxu0 0.0
    %189 = vmatprep.subr.mxu0 0.0
    %190 = vmatpush1.msra.mxu0 0.0
    %191 = vmatprep.subr.mxu0 0.0
    %192 = vmatpush1.msra.mxu0 0.0
    %193 = vmatprep.subr.mxu0 0.0
    %194 = vmatpush1.msra.mxu0 0.0
    %195 = vmatprep.subr.mxu0 0.0
    %196 = vmatpush1.msra.mxu0 0.0
    %197 = vmatprep.subr.mxu0 0.0
    %198 = vmatpush1.msra.mxu0 0.0
    %199 = vmatprep.subr.mxu0 0.0
    %200 = vmatpush1.msra.mxu0 0.0
    %201 = vmatprep.subr.mxu0 0.0
    %202 = vmatpush1.msra.mxu0 0.0
    %203 = vmatprep.subr.mxu0 0.0
    %204 = vmatpush1.msra.mxu0 0.0
    %205 = vmatprep.subr.mxu0 0.0
    %206 = vmatpush1.msra.mxu0 0.0
    %207 = vmatprep.subr.mxu0 0.0
    %208 = vmatpush1.msra.mxu0 0.0
    %209 = vmatprep.subr.mxu0 0.0
    %210 = vmatpush1.msra.mxu0 0.0
    %211 = vmatprep.subr.mxu0 0.0
    %212 = vmatpush1.msra.mxu0 0.0
    %213 = vmatprep.subr.mxu0 0.0
    %214 = vmatpush1.msra.mxu0 0.0
    %215 = vmatprep.subr.mxu0 0.0
    %216 = vmatpush1.msra.mxu0 0.0
    %217 = vmatprep.subr.mxu0 0.0
    %218 = vmatpush1.msra.mxu0 0.0
    %219 = vmatprep.mubr.f32.mxu0 0.0
    %220 = vmatmul.mubr.f32.gmra.mrb[0].mxu0 %v108
    %v221 = vpop.f32.mrb[0].mxu0
    %v222 = vadd.f32 %v104, %v221
    %v223 = vpop.f32.mrb[0].mxu0
    %224 = vmatprep.mubr.f32.mxu0 0.0
    %225 = vmatmul.mubr.f32.gmra.mrb[0].mxu0 %v111
    %v226 = vpop.f32.mrb[0].mxu0
    %v227 = vadd.f32 %v104, %v226
    %v228 = vpop.f32.mrb[0].mxu0
    %229 = vmatprep.mubr.f32.mxu0 0.0
    %230 = vmatmul.mubr.f32.gmra.mrb[0].mxu0 %v114
    %v231 = vpop.f32.mrb[0].mxu0
    %v232 = vadd.f32 %v104, %v231
    %v233 = vpop.f32.mrb[0].mxu0
    %234 = vmatprep.mubr.f32.mxu0 0.0
    %235 = vmatmul.mubr.f32.gmra.mrb[0].mxu0 %v117
    %v236 = vpop.f32.mrb[0].mxu0
    %v237 = vadd.f32 %v104, %v236
    %v238 = vpop.f32.mrb[0].mxu0
    %239 = vmatprep.mubr.f32.mxu0 0.0
    %240 = vmatmul.mubr.f32.gmra.mrb[0].mxu0 %v120
    %v241 = vpop.f32.mrb[0].mxu0
    %v242 = vadd.f32 %v104, %v241
    %v243 = vpop.f32.mrb[0].mxu0
    %244 = vmatprep.mubr.f32.mxu0 0.0
    %245 = vmatmul.mubr.f32.gmra.mrb[0].mxu0 %v123
    %v246 = vpop.f32.mrb[0].mxu0
    %v247 = vadd.f32 %v104, %v246
    %v248 = vpop.f32.mrb[0].mxu0
    %249 = vmatprep.mubr.f32.mxu0 0.0
    %250 = vmatmul.mubr.f32.gmra.mrb[0].mxu0 %v126
    %v251 = vpop.f32.mrb[0].mxu0
    %v252 = vadd.f32 %v104, %v251
    %v253 = vpop.f32.mrb[0].mxu0
    %254 = vmatprep.mubr.f32.mxu0 0.0
    %255 = vmatmul.mubr.f32.gmra.mrb[0].mxu0 %v129
    %v256 = vpop.f32.mrb[0].mxu0
    %v257 = vadd.f32 %v104, %v256
    %v258 = vpop.f32.mrb[0].mxu0
    %259 = vmatprep.mubr.f32.mxu0 0.0
    %260 = vmatmul.mubr.f32.gmra.mrb[0].mxu0 %v132
    %v261 = vpop.f32.mrb[0].mxu0
    %v262 = vadd.f32 %v104, %v261
    %v263 = vpop.f32.mrb[0].mxu0
    %264 = vmatprep.mubr.f32.mxu0 0.0
    %265 = vmatmul.mubr.f32.gmra.mrb[0].mxu0 %v135
    %v266 = vpop.f32.mrb[0].mxu0
    %v267 = vadd.f32 %v104, %v266
    %v268 = vpop.f32.mrb[0].mxu0
    %269 = vmatprep.mubr.f32.mxu0 0.0
    %270 = vmatmul.mubr.f32.gmra.mrb[0].mxu0 %v138
    %v271 = vpop.f32.mrb[0].mxu0
    %v272 = vadd.f32 %v104, %v271
    %v273 = vpop.f32.mrb[0].mxu0
    %274 = vmatprep.mubr.f32.mxu0 0.0
    %275 = vmatmul.mubr.f32.gmra.mrb[0].mxu0 %v141
    %v276 = vpop.f32.mrb[0].mxu0
    %v277 = vadd.f32 %v104, %v276
    %v278 = vpop.f32.mrb[0].mxu0
    %279 = vmatprep.mubr.f32.mxu0 0.0
    %280 = vmatmul.mubr.f32.gmra.mrb[0].mxu0 %v144
    %v281 = vpop.f32.mrb[0].mxu0
    %v282 = vadd.f32 %v104, %v281
    %v283 = vpop.f32.mrb[0].mxu0
    %284 = vmatprep.mubr.f32.mxu0 0.0
    %285 = vmatmul.mubr.f32.gmra.mrb[0].mxu0 %v147
    %v286 = vpop.f32.mrb[0].mxu0
    %v287 = vadd.f32 %v104, %v286
    %v288 = vpop.f32.mrb[0].mxu0
    %289 = vmatprep.mubr.f32.mxu0 0.0
    %290 = vmatmul.mubr.f32.gmra.mrb[0].mxu0 %v150
    %v291 = vpop.f32.mrb[0].mxu0
    %v292 = vadd.f32 %v104, %v291
    %v293 = vpop.f32.mrb[0].mxu0
    %294 = vmatprep.mubr.f32.mxu0 0.0
    %295 = vmatmul.mubr.f32.gmra.mrb[0].mxu0 %v153
    %v296 = vpop.f32.mrb[0].mxu0
    %v297 = vadd.f32 %v104, %v296
    %v298 = vpop.f32.mrb[0].mxu0
    %299 = vdwg.mxu0
    %v300 = vmax.f32 %v222, 0.0
    %v301 = vmax.f32 %v227, 0.0
    %v302 = vmax.f32 %v232, 0.0
    %v303 = vmax.f32 %v237, 0.0
    %v304 = vmax.f32 %v242, 0.0
    %v305 = vmax.f32 %v247, 0.0
    %v306 = vmax.f32 %v252, 0.0
    %v307 = vmax.f32 %v257, 0.0
    %v308 = vmax.f32 %v262, 0.0
    %v309 = vmax.f32 %v267, 0.0
    %v310 = vmax.f32 %v272, 0.0
    %v311 = vmax.f32 %v277, 0.0
    %v312 = vmax.f32 %v282, 0.0
    %v313 = vmax.f32 %v287, 0.0
    %v314 = vmax.f32 %v292, 0.0
    %v315 = vmax.f32 %v297, 0.0
    %v316 = vld [vmem:[#allocation3] sm:$0xff]
    %v317 = vld [vmem:[#allocation3 + $0x8] sm:$0xff]
    %v318 = vld [vmem:[#allocation3 + $0x10] sm:$0xff]
    %v319 = vld [vmem:[#allocation3 + $0x18] sm:$0xff]
    %v320 = vld [vmem:[#allocation3 + $0x20] sm:$0xff]
    %v321 = vld [vmem:[#allocation3 + $0x28] sm:$0xff]
    %v322 = vld [vmem:[#allocation3 + $0x30] sm:$0xff]
    %v323 = vld [vmem:[#allocation3 + $0x38] sm:$0xff]
    %v324 = vld [vmem:[#allocation3 + $0x40] sm:$0xff]
    %v325 = vld [vmem:[#allocation3 + $0x48] sm:$0xff]
    %v326 = vld [vmem:[#allocation3 + $0x50] sm:$0xff]
    %v327 = vld [vmem:[#allocation3 + $0x58] sm:$0xff]
    %v328 = vld [vmem:[#allocation3 + $0x60] sm:$0xff]
    %v329 = vld [vmem:[#allocation3 + $0x68] sm:$0xff]
    %v330 = vld [vmem:[#allocation3 + $0x70] sm:$0xff]
    %v331 = vld [vmem:[#allocation3 + $0x78] sm:$0xff]
    %v332 = vld [vmem:[#allocation3 + $0x80] sm:$0xff]
    %v333 = vld [vmem:[#allocation3 + $0x88] sm:$0xff]
    %v334 = vld [vmem:[#allocation3 + $0x90] sm:$0xff]
    %v335 = vld [vmem:[#allocation3 + $0x98] sm:$0xff]
    %v336 = vld [vmem:[#allocation3 + $0xa0] sm:$0xff]
    %v337 = vld [vmem:[#allocation3 + $0xa8] sm:$0xff]
    %v338 = vld [vmem:[#allocation3 + $0xb0] sm:$0xff]
    %v339 = vld [vmem:[#allocation3 + $0xb8] sm:$0xff]
    %v340 = vld [vmem:[#allocation3 + $0xc0] sm:$0xff]
    %v341 = vld [vmem:[#allocation3 + $0xc8] sm:$0xff]
    %v342 = vld [vmem:[#allocation3 + $0xd0] sm:$0xff]
    %v343 = vld [vmem:[#allocation3 + $0xd8] sm:$0xff]
    %v344 = vld [vmem:[#allocation3 + $0xe0] sm:$0xff]
    %v345 = vld [vmem:[#allocation3 + $0xe8] sm:$0xff]
    %v346 = vld [vmem:[#allocation3 + $0xf0] sm:$0xff]
    %v347 = vld [vmem:[#allocation3 + $0xf8] sm:$0xff]
    %v348 = vld [vmem:[%s4] sm:$0x3]
    %v350 = vlaneseq
    %v351 = vshrl.u32 %v350, 7
    %v352 = vsub.s32 0, %v351
    %v353 = vrot.slane %v348, %v352
    %v354 = vlaneseq
    %v355 = vshrl.u32 %v354, 7
    %v356 = vsub.s32 1, %v355
    %v357 = vrot.slane %v348, %v356
    %360 = vmatprep.subr.mxu0 %v317
    %361 = vmatpush1.msra.mxu0 %v316
    %362 = vmatprep.subr.mxu0 %v319
    %363 = vmatpush1.msra.mxu0 %v318
    %364 = vmatprep.subr.mxu0 %v321
    %365 = vmatpush1.msra.mxu0 %v320
    %366 = vmatprep.subr.mxu0 %v323
    %367 = vmatpush1.msra.mxu0 %v322
    %368 = vmatprep.subr.mxu0 %v325
    %369 = vmatpush1.msra.mxu0 %v324
    %370 = vmatprep.subr.mxu0 %v327
    %371 = vmatpush1.msra.mxu0 %v326
    %372 = vmatprep.subr.mxu0 %v329
    %373 = vmatpush1.msra.mxu0 %v328
    %374 = vmatprep.subr.mxu0 %v331
    %375 = vmatpush1.msra.mxu0 %v330
    %376 = vmatprep.subr.mxu0 %v333
    %377 = vmatpush1.msra.mxu0 %v332
    %378 = vmatprep.subr.mxu0 %v335
    %379 = vmatpush1.msra.mxu0 %v334
    %380 = vmatprep.subr.mxu0 %v337
    %381 = vmatpush1.msra.mxu0 %v336
    %382 = vmatprep.subr.mxu0 %v339
    %383 = vmatpush1.msra.mxu0 %v338
    %384 = vmatprep.subr.mxu0 %v341
    %385 = vmatpush1.msra.mxu0 %v340
    %386 = vmatprep.subr.mxu0 %v343
    %387 = vmatpush1.msra.mxu0 %v342
    %388 = vmatprep.subr.mxu0 %v345
    %389 = vmatpush1.msra.mxu0 %v344
    %390 = vmatprep.subr.mxu0 %v347
    %391 = vmatpush1.msra.mxu0 %v346
    %392 = vmatprep.subr.mxu0 0.0
    %393 = vmatpush1.msra.mxu0 0.0
    %394 = vmatprep.subr.mxu0 0.0
    %395 = vmatpush1.msra.mxu0 0.0
    %396 = vmatprep.subr.mxu0 0.0
    %397 = vmatpush1.msra.mxu0 0.0
    %398 = vmatprep.subr.mxu0 0.0
    %399 = vmatpush1.msra.mxu0 0.0
    %400 = vmatprep.subr.mxu0 0.0
    %401 = vmatpush1.msra.mxu0 0.0
    %402 = vmatprep.subr.mxu0 0.0
    %403 = vmatpush1.msra.mxu0 0.0
    %404 = vmatprep.subr.mxu0 0.0
    %405 = vmatpush1.msra.mxu0 0.0
    %406 = vmatprep.subr.mxu0 0.0
    %407 = vmatpush1.msra.mxu0 0.0
    %408 = vmatprep.subr.mxu0 0.0
    %409 = vmatpush1.msra.mxu0 0.0
    %410 = vmatprep.subr.mxu0 0.0
    %411 = vmatpush1.msra.mxu0 0.0
    %412 = vmatprep.subr.mxu0 0.0
    %413 = vmatpush1.msra.mxu0 0.0
    %414 = vmatprep.subr.mxu0 0.0
    %415 = vmatpush1.msra.mxu0 0.0
    %416 = vmatprep.subr.mxu0 0.0
    %417 = vmatpush1.msra.mxu0 0.0
    %418 = vmatprep.subr.mxu0 0.0
    %419 = vmatpush1.msra.mxu0 0.0
    %420 = vmatprep.subr.mxu0 0.0
    %421 = vmatpush1.msra.mxu0 0.0
    %422 = vmatprep.subr.mxu0 0.0
    %423 = vmatpush1.msra.mxu0 0.0
    %424 = vmatprep.mubr.f32.mxu0 0.0
    %425 = vmatmul.mubr.f32.gmra.mrb[0].mxu0 %v300
    %v426 = vpop.f32.mrb[0].mxu0
    %v427 = vadd.f32 %v353, %v426
    %v428 = vpop.f32.mrb[0].mxu0
    %v429 = vadd.f32 %v357, %v428
    %430 = vmatprep.mubr.f32.mxu0 0.0
    %431 = vmatmul.mubr.f32.gmra.mrb[0].mxu0 %v301
    %v432 = vpop.f32.mrb[0].mxu0
    %v433 = vadd.f32 %v353, %v432
    %v434 = vpop.f32.mrb[0].mxu0
    %v435 = vadd.f32 %v357, %v434
    %436 = vmatprep.mubr.f32.mxu0 0.0
    %437 = vmatmul.mubr.f32.gmra.mrb[0].mxu0 %v302
    %v438 = vpop.f32.mrb[0].mxu0
    %v439 = vadd.f32 %v353, %v438
    %v440 = vpop.f32.mrb[0].mxu0
    %v441 = vadd.f32 %v357, %v440
    %442 = vmatprep.mubr.f32.mxu0 0.0
    %443 = vmatmul.mubr.f32.gmra.mrb[0].mxu0 %v303
    %v444 = vpop.f32.mrb[0].mxu0
    %v445 = vadd.f32 %v353, %v444
    %v446 = vpop.f32.mrb[0].mxu0
    %v447 = vadd.f32 %v357, %v446
    %448 = vmatprep.mubr.f32.mxu0 0.0
    %449 = vmatmul.mubr.f32.gmra.mrb[0].mxu0 %v304
    %v450 = vpop.f32.mrb[0].mxu0
    %v451 = vadd.f32 %v353, %v450
    %v452 = vpop.f32.mrb[0].mxu0
    %v453 = vadd.f32 %v357, %v452
    %454 = vmatprep.mubr.f32.mxu0 0.0
    %455 = vmatmul.mubr.f32.gmra.mrb[0].mxu0 %v305
    %v456 = vpop.f32.mrb[0].mxu0
    %v457 = vadd.f32 %v353, %v456
    %v458 = vpop.f32.mrb[0].mxu0
    %v459 = vadd.f32 %v357, %v458
    %460 = vmatprep.mubr.f32.mxu0 0.0
    %461 = vmatmul.mubr.f32.gmra.mrb[0].mxu0 %v306
    %v462 = vpop.f32.mrb[0].mxu0
    %v463 = vadd.f32 %v353, %v462
    %v464 = vpop.f32.mrb[0].mxu0
    %v465 = vadd.f32 %v357, %v464
    %466 = vmatprep.mubr.f32.mxu0 0.0
    %467 = vmatmul.mubr.f32.gmra.mrb[0].mxu0 %v307
    %v468 = vpop.f32.mrb[0].mxu0
    %v469 = vadd.f32 %v353, %v468
    %v470 = vpop.f32.mrb[0].mxu0
    %v471 = vadd.f32 %v357, %v470
    %472 = vmatprep.mubr.f32.mxu0 0.0
    %473 = vmatmul.mubr.f32.gmra.mrb[0].mxu0 %v308
    %v474 = vpop.f32.mrb[0].mxu0
    %v475 = vadd.f32 %v353, %v474
    %v476 = vpop.f32.mrb[0].mxu0
    %v477 = vadd.f32 %v357, %v476
    %478 = vmatprep.mubr.f32.mxu0 0.0
    %479 = vmatmul.mubr.f32.gmra.mrb[0].mxu0 %v309
    %v480 = vpop.f32.mrb[0].mxu0
    %v481 = vadd.f32 %v353, %v480
    %v482 = vpop.f32.mrb[0].mxu0
    %v483 = vadd.f32 %v357, %v482
    %484 = vmatprep.mubr.f32.mxu0 0.0
    %485 = vmatmul.mubr.f32.gmra.mrb[0].mxu0 %v310
    %v486 = vpop.f32.mrb[0].mxu0
    %v487 = vadd.f32 %v353, %v486
    %v488 = vpop.f32.mrb[0].mxu0
    %v489 = vadd.f32 %v357, %v488
    %490 = vmatprep.mubr.f32.mxu0 0.0
    %491 = vmatmul.mubr.f32.gmra.mrb[0].mxu0 %v311
    %v492 = vpop.f32.mrb[0].mxu0
    %v493 = vadd.f32 %v353, %v492
    %v494 = vpop.f32.mrb[0].mxu0
    %v495 = vadd.f32 %v357, %v494
    %496 = vmatprep.mubr.f32.mxu0 0.0
    %497 = vmatmul.mubr.f32.gmra.mrb[0].mxu0 %v312
    %v498 = vpop.f32.mrb[0].mxu0
    %v499 = vadd.f32 %v353, %v498
    %v500 = vpop.f32.mrb[0].mxu0
    %v501 = vadd.f32 %v357, %v500
    %502 = vmatprep.mubr.f32.mxu0 0.0
    %503 = vmatmul.mubr.f32.gmra.mrb[0].mxu0 %v313
    %v504 = vpop.f32.mrb[0].mxu0
    %v505 = vadd.f32 %v353, %v504
    %v506 = vpop.f32.mrb[0].mxu0
    %v507 = vadd.f32 %v357, %v506
    %508 = vmatprep.mubr.f32.mxu0 0.0
    %509 = vmatmul.mubr.f32.gmra.mrb[0].mxu0 %v314
    %v510 = vpop.f32.mrb[0].mxu0
    %v511 = vadd.f32 %v353, %v510
    %v512 = vpop.f32.mrb[0].mxu0
    %v513 = vadd.f32 %v357, %v512
    %514 = vmatprep.mubr.f32.mxu0 0.0
    %515 = vmatmul.mubr.f32.gmra.mrb[0].mxu0 %v315
    %v516 = vpop.f32.mrb[0].mxu0
    %v517 = vadd.f32 %v353, %v516
    %v518 = vpop.f32.mrb[0].mxu0
    %v519 = vadd.f32 %v357, %v518
    %520 = vdwg.mxu0
    %v521 = vmax.f32 %v427, 0.0
    %v522 = vmax.f32 %v429, 0.0
    %v523 = vmax.f32 %v433, 0.0
    %v524 = vmax.f32 %v435, 0.0
    %v525 = vmax.f32 %v439, 0.0
    %v526 = vmax.f32 %v441, 0.0
    %v527 = vmax.f32 %v445, 0.0
    %v528 = vmax.f32 %v447, 0.0
    %v529 = vmax.f32 %v451, 0.0
    %v530 = vmax.f32 %v453, 0.0
    %v531 = vmax.f32 %v457, 0.0
    %v532 = vmax.f32 %v459, 0.0
    %v533 = vmax.f32 %v463, 0.0
    %v534 = vmax.f32 %v465, 0.0
    %v535 = vmax.f32 %v469, 0.0
    %v536 = vmax.f32 %v471, 0.0
    %v537 = vmax.f32 %v475, 0.0
    %v538 = vmax.f32 %v477, 0.0
    %v539 = vmax.f32 %v481, 0.0
    %v540 = vmax.f32 %v483, 0.0
    %v541 = vmax.f32 %v487, 0.0
    %v542 = vmax.f32 %v489, 0.0
    %v543 = vmax.f32 %v493, 0.0
    %v544 = vmax.f32 %v495, 0.0
    %v545 = vmax.f32 %v499, 0.0
    %v546 = vmax.f32 %v501, 0.0
    %v547 = vmax.f32 %v505, 0.0
    %v548 = vmax.f32 %v507, 0.0
    %v549 = vmax.f32 %v511, 0.0
    %v550 = vmax.f32 %v513, 0.0
    %v551 = vmax.f32 %v517, 0.0
    %v552 = vmax.f32 %v519, 0.0
    %v553 = vld [vmem:[#allocation5] sm:$0xff]
    %v554 = vld [vmem:[#allocation5 + $0x8] sm:$0xff]
    %v555 = vld [vmem:[#allocation5 + $0x10] sm:$0xff]
    %v556 = vld [vmem:[#allocation5 + $0x18] sm:$0xff]
    %v557 = vld [vmem:[#allocation5 + $0x20] sm:$0xff]
    %v558 = vld [vmem:[#allocation5 + $0x28] sm:$0xff]
    %v559 = vld [vmem:[#allocation5 + $0x30] sm:$0xff]
    %v560 = vld [vmem:[#allocation5 + $0x38] sm:$0xff]
    %v561 = vld [vmem:[#allocation5 + $0x40] sm:$0xff]
    %v562 = vld [vmem:[#allocation5 + $0x48] sm:$0xff]
    %v563 = vld [vmem:[#allocation5 + $0x50] sm:$0xff]
    %v564 = vld [vmem:[#allocation5 + $0x58] sm:$0xff]
    %v565 = vld [vmem:[#allocation5 + $0x60] sm:$0xff]
    %v566 = vld [vmem:[#allocation5 + $0x68] sm:$0xff]
    %v567 = vld [vmem:[#allocation5 + $0x70] sm:$0xff]
    %v568 = vld [vmem:[#allocation5 + $0x78] sm:$0xff]
    %v569 = vld [vmem:[#allocation5 + $0x80] sm:$0xff]
    %v570 = vld [vmem:[#allocation5 + $0x88] sm:$0xff]
    %v571 = vld [vmem:[#allocation5 + $0x90] sm:$0xff]
    %v572 = vld [vmem:[#allocation5 + $0x98] sm:$0xff]
    %v573 = vld [vmem:[#allocation5 + $0xa0] sm:$0xff]
    %v574 = vld [vmem:[#allocation5 + $0xa8] sm:$0xff]
    %v575 = vld [vmem:[#allocation5 + $0xb0] sm:$0xff]
    %v576 = vld [vmem:[#allocation5 + $0xb8] sm:$0xff]
    %v577 = vld [vmem:[#allocation5 + $0xc0] sm:$0xff]
    %v578 = vld [vmem:[#allocation5 + $0xc8] sm:$0xff]
    %v579 = vld [vmem:[#allocation5 + $0xd0] sm:$0xff]
    %v580 = vld [vmem:[#allocation5 + $0xd8] sm:$0xff]
    %v581 = vld [vmem:[#allocation5 + $0xe0] sm:$0xff]
    %v582 = vld [vmem:[#allocation5 + $0xe8] sm:$0xff]
    %v583 = vld [vmem:[#allocation5 + $0xf0] sm:$0xff]
    %v584 = vld [vmem:[#allocation5 + $0xf8] sm:$0xff]
    %v585 = vld [vmem:[#allocation5 + $0x100] sm:$0xff]
    %v586 = vld [vmem:[#allocation5 + $0x108] sm:$0xff]
    %v587 = vld [vmem:[#allocation5 + $0x110] sm:$0xff]
    %v588 = vld [vmem:[#allocation5 + $0x118] sm:$0xff]
    %v589 = vld [vmem:[#allocation5 + $0x120] sm:$0xff]
    %v590 = vld [vmem:[#allocation5 + $0x128] sm:$0xff]
    %v591 = vld [vmem:[#allocation5 + $0x130] sm:$0xff]
    %v592 = vld [vmem:[#allocation5 + $0x138] sm:$0xff]
    %v593 = vld [vmem:[#allocation5 + $0x140] sm:$0xff]
    %v594 = vld [vmem:[#allocation5 + $0x148] sm:$0xff]
    %v595 = vld [vmem:[#allocation5 + $0x150] sm:$0xff]
    %v596 = vld [vmem:[#allocation5 + $0x158] sm:$0xff]
    %v597 = vld [vmem:[#allocation5 + $0x160] sm:$0xff]
    %v598 = vld [vmem:[#allocation5 + $0x168] sm:$0xff]
    %v599 = vld [vmem:[#allocation5 + $0x170] sm:$0xff]
    %v600 = vld [vmem:[#allocation5 + $0x178] sm:$0xff]
    %v601 = vld [vmem:[#allocation5 + $0x180] sm:$0xff]
    %v602 = vld [vmem:[#allocation5 + $0x188] sm:$0xff]
    %v603 = vld [vmem:[#allocation5 + $0x190] sm:$0xff]
    %v604 = vld [vmem:[#allocation5 + $0x198] sm:$0xff]
    %v605 = vld [vmem:[#allocation5 + $0x1a0] sm:$0xff]
    %v606 = vld [vmem:[#allocation5 + $0x1a8] sm:$0xff]
    %v607 = vld [vmem:[#allocation5 + $0x1b0] sm:$0xff]
    %v608 = vld [vmem:[#allocation5 + $0x1b8] sm:$0xff]
    %v609 = vld [vmem:[#allocation5 + $0x1c0] sm:$0xff]
    %v610 = vld [vmem:[#allocation5 + $0x1c8] sm:$0xff]
    %v611 = vld [vmem:[#allocation5 + $0x1d0] sm:$0xff]
    %v612 = vld [vmem:[#allocation5 + $0x1d8] sm:$0xff]
    %v613 = vld [vmem:[#allocation5 + $0x1e0] sm:$0xff]
    %v614 = vld [vmem:[#allocation5 + $0x1e8] sm:$0xff]
    %v615 = vld [vmem:[#allocation5 + $0x1f0] sm:$0xff]
    %v616 = vld [vmem:[#allocation5 + $0x1f8] sm:$0xff]
    %v617 = vld [vmem:[%s6] sm:$0x3]
    %v619 = vlaneseq
    %v620 = vshrl.u32 %v619, 7
    %v621 = vsub.s32 0, %v620
    %v622 = vrot.slane %v617, %v621
    %v623 = vlaneseq
    %v624 = vshrl.u32 %v623, 7
    %v625 = vsub.s32 1, %v624
    %v626 = vrot.slane %v617, %v625
    %629 = vmatprep.subr.mxu0 %v554
    %630 = vmatpush1.msra.mxu0 %v553
    %631 = vmatprep.subr.mxu0 %v556
    %632 = vmatpush1.msra.mxu0 %v555
    %633 = vmatprep.subr.mxu0 %v558
    %634 = vmatpush1.msra.mxu0 %v557
    %635 = vmatprep.subr.mxu0 %v560
    %636 = vmatpush1.msra.mxu0 %v559
    %637 = vmatprep.subr.mxu0 %v562
    %638 = vmatpush1.msra.mxu0 %v561
    %639 = vmatprep.subr.mxu0 %v564
    %640 = vmatpush1.msra.mxu0 %v563
    %641 = vmatprep.subr.mxu0 %v566
    %642 = vmatpush1.msra.mxu0 %v565
    %643 = vmatprep.subr.mxu0 %v568
    %644 = vmatpush1.msra.mxu0 %v567
    %645 = vmatprep.subr.mxu0 %v570
    %646 = vmatpush1.msra.mxu0 %v569
    %647 = vmatprep.subr.mxu0 %v572
    %648 = vmatpush1.msra.mxu0 %v571
    %649 = vmatprep.subr.mxu0 %v574
    %650 = vmatpush1.msra.mxu0 %v573
    %651 = vmatprep.subr.mxu0 %v576
    %652 = vmatpush1.msra.mxu0 %v575
    %653 = vmatprep.subr.mxu0 %v578
    %654 = vmatpush1.msra.mxu0 %v577
    %655 = vmatprep.subr.mxu0 %v580
    %656 = vmatpush1.msra.mxu0 %v579
    %657 = vmatprep.subr.mxu0 %v582
    %658 = vmatpush1.msra.mxu0 %v581
    %659 = vmatprep.subr.mxu0 %v584
    %660 = vmatpush1.msra.mxu0 %v583
    %661 = vmatprep.subr.mxu0 %v586
    %662 = vmatpush1.msra.mxu0 %v585
    %663 = vmatprep.subr.mxu0 %v588
    %664 = vmatpush1.msra.mxu0 %v587
    %665 = vmatprep.subr.mxu0 %v590
    %666 = vmatpush1.msra.mxu0 %v589
    %667 = vmatprep.subr.mxu0 %v592
    %668 = vmatpush1.msra.mxu0 %v591
    %669 = vmatprep.subr.mxu0 %v594
    %670 = vmatpush1.msra.mxu0 %v593
    %671 = vmatprep.subr.mxu0 %v596
    %672 = vmatpush1.msra.mxu0 %v595
    %673 = vmatprep.subr.mxu0 %v598
    %674 = vmatpush1.msra.mxu0 %v597
    %675 = vmatprep.subr.mxu0 %v600
    %676 = vmatpush1.msra.mxu0 %v599
    %677 = vmatprep.subr.mxu0 %v602
    %678 = vmatpush1.msra.mxu0 %v601
    %679 = vmatprep.subr.mxu0 %v604
    %680 = vmatpush1.msra.mxu0 %v603
    %681 = vmatprep.subr.mxu0 %v606
    %682 = vmatpush1.msra.mxu0 %v605
    %683 = vmatprep.subr.mxu0 %v608
    %684 = vmatpush1.msra.mxu0 %v607
    %685 = vmatprep.subr.mxu0 %v610
    %686 = vmatpush1.msra.mxu0 %v609
    %687 = vmatprep.subr.mxu0 %v612
    %688 = vmatpush1.msra.mxu0 %v611
    %689 = vmatprep.subr.mxu0 %v614
    %690 = vmatpush1.msra.mxu0 %v613
    %691 = vmatprep.subr.mxu0 %v616
    %692 = vmatpush1.msra.mxu0 %v615
    %693 = vmatprep.mubr.f32.mxu0 %v522
    %694 = vmatmul.mubr.f32.gmra.mrb[0].mxu0 %v521
    %v695 = vpop.f32.mrb[0].mxu0
    %v696 = vadd.f32 %v622, %v695
    %v697 = vpop.f32.mrb[0].mxu0
    %v698 = vadd.f32 %v626, %v697
    %699 = vmatprep.mubr.f32.mxu0 %v524
    %700 = vmatmul.mubr.f32.gmra.mrb[0].mxu0 %v523
    %v701 = vpop.f32.mrb[0].mxu0
    %v702 = vadd.f32 %v622, %v701
    %v703 = vpop.f32.mrb[0].mxu0
    %v704 = vadd.f32 %v626, %v703
    %705 = vmatprep.mubr.f32.mxu0 %v526
    %706 = vmatmul.mubr.f32.gmra.mrb[0].mxu0 %v525
    %v707 = vpop.f32.mrb[0].mxu0
    %v708 = vadd.f32 %v622, %v707
    %v709 = vpop.f32.mrb[0].mxu0
    %v710 = vadd.f32 %v626, %v709
    %711 = vmatprep.mubr.f32.mxu0 %v528
    %712 = vmatmul.mubr.f32.gmra.mrb[0].mxu0 %v527
    %v713 = vpop.f32.mrb[0].mxu0
    %v714 = vadd.f32 %v622, %v713
    %v715 = vpop.f32.mrb[0].mxu0
    %v716 = vadd.f32 %v626, %v715
    %717 = vmatprep.mubr.f32.mxu0 %v530
    %718 = vmatmul.mubr.f32.gmra.mrb[0].mxu0 %v529
    %v719 = vpop.f32.mrb[0].mxu0
    %v720 = vadd.f32 %v622, %v719
    %v721 = vpop.f32.mrb[0].mxu0
    %v722 = vadd.f32 %v626, %v721
    %723 = vmatprep.mubr.f32.mxu0 %v532
    %724 = vmatmul.mubr.f32.gmra.mrb[0].mxu0 %v531
    %v725 = vpop.f32.mrb[0].mxu0
    %v726 = vadd.f32 %v622, %v725
    %v727 = vpop.f32.mrb[0].mxu0
    %v728 = vadd.f32 %v626, %v727
    %729 = vmatprep.mubr.f32.mxu0 %v534
    %730 = vmatmul.mubr.f32.gmra.mrb[0].mxu0 %v533
    %v731 = vpop.f32.mrb[0].mxu0
    %v732 = vadd.f32 %v622, %v731
    %v733 = vpop.f32.mrb[0].mxu0
    %v734 = vadd.f32 %v626, %v733
    %735 = vmatprep.mubr.f32.mxu0 %v536
    %736 = vmatmul.mubr.f32.gmra.mrb[0].mxu0 %v535
    %v737 = vpop.f32.mrb[0].mxu0
    %v738 = vadd.f32 %v622, %v737
    %v739 = vpop.f32.mrb[0].mxu0
    %v740 = vadd.f32 %v626, %v739
    %741 = vmatprep.mubr.f32.mxu0 %v538
    %742 = vmatmul.mubr.f32.gmra.mrb[0].mxu0 %v537
    %v743 = vpop.f32.mrb[0].mxu0
    %v744 = vadd.f32 %v622, %v743
    %v745 = vpop.f32.mrb[0].mxu0
    %v746 = vadd.f32 %v626, %v745
    %747 = vmatprep.mubr.f32.mxu0 %v540
    %748 = vmatmul.mubr.f32.gmra.mrb[0].mxu0 %v539
    %v749 = vpop.f32.mrb[0].mxu0
    %v750 = vadd.f32 %v622, %v749
    %v751 = vpop.f32.mrb[0].mxu0
    %v752 = vadd.f32 %v626, %v751
    %753 = vmatprep.mubr.f32.mxu0 %v542
    %754 = vmatmul.mubr.f32.gmra.mrb[0].mxu0 %v541
    %v755 = vpop.f32.mrb[0].mxu0
    %v756 = vadd.f32 %v622, %v755
    %v757 = vpop.f32.mrb[0].mxu0
    %v758 = vadd.f32 %v626, %v757
    %759 = vmatprep.mubr.f32.mxu0 %v544
    %760 = vmatmul.mubr.f32.gmra.mrb[0].mxu0 %v543
    %v761 = vpop.f32.mrb[0].mxu0
    %v762 = vadd.f32 %v622, %v761
    %v763 = vpop.f32.mrb[0].mxu0
    %v764 = vadd.f32 %v626, %v763
    %765 = vmatprep.mubr.f32.mxu0 %v546
    %766 = vmatmul.mubr.f32.gmra.mrb[0].mxu0 %v545
    %v767 = vpop.f32.mrb[0].mxu0
    %v768 = vadd.f32 %v622, %v767
    %v769 = vpop.f32.mrb[0].mxu0
    %v770 = vadd.f32 %v626, %v769
    %771 = vmatprep.mubr.f32.mxu0 %v548
    %772 = vmatmul.mubr.f32.gmra.mrb[0].mxu0 %v547
    %v773 = vpop.f32.mrb[0].mxu0
    %v774 = vadd.f32 %v622, %v773
    %v775 = vpop.f32.mrb[0].mxu0
    %v776 = vadd.f32 %v626, %v775
    %777 = vmatprep.mubr.f32.mxu0 %v550
    %778 = vmatmul.mubr.f32.gmra.mrb[0].mxu0 %v549
    %v779 = vpop.f32.mrb[0].mxu0
    %v780 = vadd.f32 %v622, %v779
    %v781 = vpop.f32.mrb[0].mxu0
    %v782 = vadd.f32 %v626, %v781
    %783 = vmatprep.mubr.f32.mxu0 %v552
    %784 = vmatmul.mubr.f32.gmra.mrb[0].mxu0 %v551
    %v785 = vpop.f32.mrb[0].mxu0
    %v786 = vadd.f32 %v622, %v785
    %v787 = vpop.f32.mrb[0].mxu0
    %v788 = vadd.f32 %v626, %v787
    %789 = vdwg.mxu0
    %v790 = vmax.f32 %v696, 0.0
    %v791 = vmax.f32 %v698, 0.0
    %v792 = vmax.f32 %v702, 0.0
    %v793 = vmax.f32 %v704, 0.0
    %v794 = vmax.f32 %v708, 0.0
    %v795 = vmax.f32 %v710, 0.0
    %v796 = vmax.f32 %v714, 0.0
    %v797 = vmax.f32 %v716, 0.0
    %v798 = vmax.f32 %v720, 0.0
    %v799 = vmax.f32 %v722, 0.0
    %v800 = vmax.f32 %v726, 0.0
    %v801 = vmax.f32 %v728, 0.0
    %v802 = vmax.f32 %v732, 0.0
    %v803 = vmax.f32 %v734, 0.0
    %v804 = vmax.f32 %v738, 0.0
    %v805 = vmax.f32 %v740, 0.0
    %v806 = vmax.f32 %v744, 0.0
    %v807 = vmax.f32 %v746, 0.0
    %v808 = vmax.f32 %v750, 0.0
    %v809 = vmax.f32 %v752, 0.0
    %v810 = vmax.f32 %v756, 0.0
    %v811 = vmax.f32 %v758, 0.0
    %v812 = vmax.f32 %v762, 0.0
    %v813 = vmax.f32 %v764, 0.0
    %v814 = vmax.f32 %v768, 0.0
    %v815 = vmax.f32 %v770, 0.0
    %v816 = vmax.f32 %v774, 0.0
    %v817 = vmax.f32 %v776, 0.0
    %v818 = vmax.f32 %v780, 0.0
    %v819 = vmax.f32 %v782, 0.0
    %v820 = vmax.f32 %v786, 0.0
    %v821 = vmax.f32 %v788, 0.0
    %v822 = vld [vmem:[#allocation7] sm:$0xff]
    %v823 = vld [vmem:[#allocation7 + $0x8] sm:$0xff]
    %v824 = vld [vmem:[#allocation7 + $0x10] sm:$0xff]
    %v825 = vld [vmem:[#allocation7 + $0x18] sm:$0xff]
    %v826 = vld [vmem:[#allocation7 + $0x20] sm:$0xff]
    %v827 = vld [vmem:[#allocation7 + $0x28] sm:$0xff]
    %v828 = vld [vmem:[#allocation7 + $0x30] sm:$0xff]
    %v829 = vld [vmem:[#allocation7 + $0x38] sm:$0xff]
    %v830 = vld [vmem:[#allocation7 + $0x40] sm:$0xff]
    %v831 = vld [vmem:[#allocation7 + $0x48] sm:$0xff]
    %v832 = vld [vmem:[#allocation7 + $0x50] sm:$0xff]
    %v833 = vld [vmem:[#allocation7 + $0x58] sm:$0xff]
    %v834 = vld [vmem:[#allocation7 + $0x60] sm:$0xff]
    %v835 = vld [vmem:[#allocation7 + $0x68] sm:$0xff]
    %v836 = vld [vmem:[#allocation7 + $0x70] sm:$0xff]
    %v837 = vld [vmem:[#allocation7 + $0x78] sm:$0xff]
    %v838 = vld [vmem:[#allocation7 + $0x80] sm:$0xff]
    %v839 = vld [vmem:[#allocation7 + $0x88] sm:$0xff]
    %v840 = vld [vmem:[#allocation7 + $0x90] sm:$0xff]
    %v841 = vld [vmem:[#allocation7 + $0x98] sm:$0xff]
    %v842 = vld [vmem:[#allocation7 + $0xa0] sm:$0xff]
    %v843 = vld [vmem:[#allocation7 + $0xa8] sm:$0xff]
    %v844 = vld [vmem:[#allocation7 + $0xb0] sm:$0xff]
    %v845 = vld [vmem:[#allocation7 + $0xb8] sm:$0xff]
    %v846 = vld [vmem:[#allocation7 + $0xc0] sm:$0xff]
    %v847 = vld [vmem:[#allocation7 + $0xc8] sm:$0xff]
    %v848 = vld [vmem:[#allocation7 + $0xd0] sm:$0xff]
    %v849 = vld [vmem:[#allocation7 + $0xd8] sm:$0xff]
    %v850 = vld [vmem:[#allocation7 + $0xe0] sm:$0xff]
    %v851 = vld [vmem:[#allocation7 + $0xe8] sm:$0xff]
    %v852 = vld [vmem:[#allocation7 + $0xf0] sm:$0xff]
    %v853 = vld [vmem:[#allocation7 + $0xf8] sm:$0xff]
    %v854 = vld [vmem:[%s8] sm:$0x1]
    %v856 = vlaneseq
    %v857 = vshrl.u32 %v856, 7
    %v858 = vsub.s32 0, %v857
    %v859 = vrot.slane %v854, %v858
    %861 = vmatprep.subr.mxu0 0.0
    %862 = vmatpush1.msra.mxu0 %v822
    %863 = vmatprep.subr.mxu0 0.0
    %864 = vmatpush1.msra.mxu0 %v823
    %865 = vmatprep.subr.mxu0 0.0
    %866 = vmatpush1.msra.mxu0 %v824
    %867 = vmatprep.subr.mxu0 0.0
    %868 = vmatpush1.msra.mxu0 %v825
    %869 = vmatprep.subr.mxu0 0.0
    %870 = vmatpush1.msra.mxu0 %v826
    %871 = vmatprep.subr.mxu0 0.0
    %872 = vmatpush1.msra.mxu0 %v827
    %873 = vmatprep.subr.mxu0 0.0
    %874 = vmatpush1.msra.mxu0 %v828
    %875 = vmatprep.subr.mxu0 0.0
    %876 = vmatpush1.msra.mxu0 %v829
    %877 = vmatprep.subr.mxu0 0.0
    %878 = vmatpush1.msra.mxu0 %v830
    %879 = vmatprep.subr.mxu0 0.0
    %880 = vmatpush1.msra.mxu0 %v831
    %881 = vmatprep.subr.mxu0 0.0
    %882 = vmatpush1.msra.mxu0 %v832
    %883 = vmatprep.subr.mxu0 0.0
    %884 = vmatpush1.msra.mxu0 %v833
    %885 = vmatprep.subr.mxu0 0.0
    %886 = vmatpush1.msra.mxu0 %v834
    %887 = vmatprep.subr.mxu0 0.0
    %888 = vmatpush1.msra.mxu0 %v835
    %889 = vmatprep.subr.mxu0 0.0
    %890 = vmatpush1.msra.mxu0 %v836
    %891 = vmatprep.subr.mxu0 0.0
    %892 = vmatpush1.msra.mxu0 %v837
    %893 = vmatprep.subr.mxu0 0.0
    %894 = vmatpush1.msra.mxu0 %v838
    %895 = vmatprep.subr.mxu0 0.0
    %896 = vmatpush1.msra.mxu0 %v839
    %897 = vmatprep.subr.mxu0 0.0
    %898 = vmatpush1.msra.mxu0 %v840
    %899 = vmatprep.subr.mxu0 0.0
    %900 = vmatpush1.msra.mxu0 %v841
    %901 = vmatprep.subr.mxu0 0.0
    %902 = vmatpush1.msra.mxu0 %v842
    %903 = vmatprep.subr.mxu0 0.0
    %904 = vmatpush1.msra.mxu0 %v843
    %905 = vmatprep.subr.mxu0 0.0
    %906 = vmatpush1.msra.mxu0 %v844
    %907 = vmatprep.subr.mxu0 0.0
    %908 = vmatpush1.msra.mxu0 %v845
    %909 = vmatprep.subr.mxu0 0.0
    %910 = vmatpush1.msra.mxu0 %v846
    %911 = vmatprep.subr.mxu0 0.0
    %912 = vmatpush1.msra.mxu0 %v847
    %913 = vmatprep.subr.mxu0 0.0
    %914 = vmatpush1.msra.mxu0 %v848
    %915 = vmatprep.subr.mxu0 0.0
    %916 = vmatpush1.msra.mxu0 %v849
    %917 = vmatprep.subr.mxu0 0.0
    %918 = vmatpush1.msra.mxu0 %v850
    %919 = vmatprep.subr.mxu0 0.0
    %920 = vmatpush1.msra.mxu0 %v851
    %921 = vmatprep.subr.mxu0 0.0
    %922 = vmatpush1.msra.mxu0 %v852
    %923 = vmatprep.subr.mxu0 0.0
    %924 = vmatpush1.msra.mxu0 %v853
    %925 = vmatprep.mubr.f32.mxu0 %v791
    %926 = vmatmul.mubr.f32.gmra.mrb[0].mxu0 %v790
    %v927 = vpop.f32.mrb[0].mxu0
    %v928 = vadd.f32 %v859, %v927
    %v929 = vpop.f32.mrb[0].mxu0
    %930 = vmatprep.mubr.f32.mxu0 %v793
    %931 = vmatmul.mubr.f32.gmra.mrb[0].mxu0 %v792
    %v932 = vpop.f32.mrb[0].mxu0
    %v933 = vadd.f32 %v859, %v932
    %v934 = vpop.f32.mrb[0].mxu0
    %935 = vmatprep.mubr.f32.mxu0 %v795
    %936 = vmatmul.mubr.f32.gmra.mrb[0].mxu0 %v794
    %v937 = vpop.f32.mrb[0].mxu0
    %v938 = vadd.f32 %v859, %v937
    %v939 = vpop.f32.mrb[0].mxu0
    %940 = vmatprep.mubr.f32.mxu0 %v797
    %941 = vmatmul.mubr.f32.gmra.mrb[0].mxu0 %v796
    %v942 = vpop.f32.mrb[0].mxu0
    %v943 = vadd.f32 %v859, %v942
    %v944 = vpop.f32.mrb[0].mxu0
    %945 = vmatprep.mubr.f32.mxu0 %v799
    %946 = vmatmul.mubr.f32.gmra.mrb[0].mxu0 %v798
    %v947 = vpop.f32.mrb[0].mxu0
    %v948 = vadd.f32 %v859, %v947
    %v949 = vpop.f32.mrb[0].mxu0
    %950 = vmatprep.mubr.f32.mxu0 %v801
    %951 = vmatmul.mubr.f32.gmra.mrb[0].mxu0 %v800
    %v952 = vpop.f32.mrb[0].mxu0
    %v953 = vadd.f32 %v859, %v952
    %v954 = vpop.f32.mrb[0].mxu0
    %955 = vmatprep.mubr.f32.mxu0 %v803
    %956 = vmatmul.mubr.f32.gmra.mrb[0].mxu0 %v802
    %v957 = vpop.f32.mrb[0].mxu0
    %v958 = vadd.f32 %v859, %v957
    %v959 = vpop.f32.mrb[0].mxu0
    %960 = vmatprep.mubr.f32.mxu0 %v805
    %961 = vmatmul.mubr.f32.gmra.mrb[0].mxu0 %v804
    %v962 = vpop.f32.mrb[0].mxu0
    %v963 = vadd.f32 %v859, %v962
    %v964 = vpop.f32.mrb[0].mxu0
    %965 = vmatprep.mubr.f32.mxu0 %v807
    %966 = vmatmul.mubr.f32.gmra.mrb[0].mxu0 %v806
    %v967 = vpop.f32.mrb[0].mxu0
    %v968 = vadd.f32 %v859, %v967
    %v969 = vpop.f32.mrb[0].mxu0
    %970 = vmatprep.mubr.f32.mxu0 %v809
    %971 = vmatmul.mubr.f32.gmra.mrb[0].mxu0 %v808
    %v972 = vpop.f32.mrb[0].mxu0
    %v973 = vadd.f32 %v859, %v972
    %v974 = vpop.f32.mrb[0].mxu0
    %975 = vmatprep.mubr.f32.mxu0 %v811
    %976 = vmatmul.mubr.f32.gmra.mrb[0].mxu0 %v810
    %v977 = vpop.f32.mrb[0].mxu0
    %v978 = vadd.f32 %v859, %v977
    %v979 = vpop.f32.mrb[0].mxu0
    %980 = vmatprep.mubr.f32.mxu0 %v813
    %981 = vmatmul.mubr.f32.gmra.mrb[0].mxu0 %v812
    %v982 = vpop.f32.mrb[0].mxu0
    %v983 = vadd.f32 %v859, %v982
    %v984 = vpop.f32.mrb[0].mxu0
    %985 = vmatprep.mubr.f32.mxu0 %v815
    %986 = vmatmul.mubr.f32.gmra.mrb[0].mxu0 %v814
    %v987 = vpop.f32.mrb[0].mxu0
    %v988 = vadd.f32 %v859, %v987
    %v989 = vpop.f32.mrb[0].mxu0
    %990 = vmatprep.mubr.f32.mxu0 %v817
    %991 = vmatmul.mubr.f32.gmra.mrb[0].mxu0 %v816
    %v992 = vpop.f32.mrb[0].mxu0
    %v993 = vadd.f32 %v859, %v992
    %v994 = vpop.f32.mrb[0].mxu0
    %995 = vmatprep.mubr.f32.mxu0 %v819
    %996 = vmatmul.mubr.f32.gmra.mrb[0].mxu0 %v818
    %v997 = vpop.f32.mrb[0].mxu0
    %v998 = vadd.f32 %v859, %v997
    %v999 = vpop.f32.mrb[0].mxu0
    %1000 = vmatprep.mubr.f32.mxu0 %v821
    %1001 = vmatmul.mubr.f32.gmra.mrb[0].mxu0 %v820
    %v1002 = vpop.f32.mrb[0].mxu0
    %v1003 = vadd.f32 %v859, %v1002
    %v1004 = vpop.f32.mrb[0].mxu0
    %1005 = vdwg.mxu0
    %v1006 = vlaneseq
    %v1007 = vand.u32 %v1006, 127
    %vm1008 = vcmp.lt.s32.totalorder %v1007, 8
    %v1009 = vsel %vm1008, %v928, -inf
    %v1010 = vsel %vm1008, %v933, -inf
    %v1011 = vsel %vm1008, %v938, -inf
    %v1012 = vsel %vm1008, %v943, -inf
    %v1013 = vsel %vm1008, %v948, -inf
    %v1014 = vsel %vm1008, %v953, -inf
    %v1015 = vsel %vm1008, %v958, -inf
    %v1016 = vsel %vm1008, %v963, -inf
    %v1017 = vsel %vm1008, %v968, -inf
    %v1018 = vsel %vm1008, %v973, -inf
    %v1019 = vsel %vm1008, %v978, -inf
    %v1020 = vsel %vm1008, %v983, -inf
    %v1021 = vsel %vm1008, %v988, -inf
    %v1022 = vsel %vm1008, %v993, -inf
    %v1023 = vsel %vm1008, %v998, -inf
    %v1024 = vsel %vm1008, %v1003, -inf
    %v1025 = vmul.f32 %v1009, 1.442695
    %v1026 = vpow.pop %v1025
    %v1027 = vmul.f32 %v1010, 1.442695
    %v1028 = vpow.pop %v1027
    %v1029 = vmul.f32 %v1011, 1.442695
    %v1030 = vpow.pop %v1029
    %v1031 = vmul.f32 %v1012, 1.442695
    %v1032 = vpow.pop %v1031
    %v1033 = vmul.f32 %v1013, 1.442695
    %v1034 = vpow.pop %v1033
    %v1035 = vmul.f32 %v1014, 1.442695
    %v1036 = vpow.pop %v1035
    %v1037 = vmul.f32 %v1015, 1.442695
    %v1038 = vpow.pop %v1037
    %v1039 = vmul.f32 %v1016, 1.442695
    %v1040 = vpow.pop %v1039
    %v1041 = vmul.f32 %v1017, 1.442695
    %v1042 = vpow.pop %v1041
    %v1043 = vmul.f32 %v1018, 1.442695
    %v1044 = vpow.pop %v1043
    %v1045 = vmul.f32 %v1019, 1.442695
    %v1046 = vpow.pop %v1045
    %v1047 = vmul.f32 %v1020, 1.442695
    %v1048 = vpow.pop %v1047
    %v1049 = vmul.f32 %v1021, 1.442695
    %v1050 = vpow.pop %v1049
    %v1051 = vmul.f32 %v1022, 1.442695
    %v1052 = vpow.pop %v1051
    %v1053 = vmul.f32 %v1023, 1.442695
    %v1054 = vpow.pop %v1053
    %v1055 = vmul.f32 %v1024, 1.442695
    %v1056 = vpow.pop %v1055
    %1057 = vadd.xlane.f32.xlu0 %v1026
    %v1058 = vpop.xlane.xlu0 %1057
    %1059 = vadd.xlane.f32.xlu0 %v1028
    %v1060 = vpop.xlane.xlu0 %1059
    %1061 = vadd.xlane.f32.xlu0 %v1030
    %v1062 = vpop.xlane.xlu0 %1061
    %1063 = vadd.xlane.f32.xlu0 %v1032
    %v1064 = vpop.xlane.xlu0 %1063
    %1065 = vadd.xlane.f32.xlu0 %v1034
    %v1066 = vpop.xlane.xlu0 %1065
    %1067 = vadd.xlane.f32.xlu0 %v1036
    %v1068 = vpop.xlane.xlu0 %1067
    %1069 = vadd.xlane.f32.xlu0 %v1038
    %v1070 = vpop.xlane.xlu0 %1069
    %1071 = vadd.xlane.f32.xlu0 %v1040
    %v1072 = vpop.xlane.xlu0 %1071
    %1073 = vadd.xlane.f32.xlu0 %v1042
    %v1074 = vpop.xlane.xlu0 %1073
    %1075 = vadd.xlane.f32.xlu0 %v1044
    %v1076 = vpop.xlane.xlu0 %1075
    %1077 = vadd.xlane.f32.xlu0 %v1046
    %v1078 = vpop.xlane.xlu0 %1077
    %1079 = vadd.xlane.f32.xlu0 %v1048
    %v1080 = vpop.xlane.xlu0 %1079
    %1081 = vadd.xlane.f32.xlu0 %v1050
    %v1082 = vpop.xlane.xlu0 %1081
    %1083 = vadd.xlane.f32.xlu0 %v1052
    %v1084 = vpop.xlane.xlu0 %1083
    %1085 = vadd.xlane.f32.xlu0 %v1054
    %v1086 = vpop.xlane.xlu0 %1085
    %1087 = vadd.xlane.f32.xlu0 %v1056
    %v1088 = vpop.xlane.xlu0 %1087
    %v1089 = vrcp.pop %v1058
    %v1090 = vrcp.pop %v1060
    %v1091 = vrcp.pop %v1062
    %v1092 = vrcp.pop %v1064
    %v1093 = vrcp.pop %v1066
    %v1094 = vrcp.pop %v1068
    %v1095 = vrcp.pop %v1070
    %v1096 = vrcp.pop %v1072
    %v1097 = vrcp.pop %v1074
    %v1098 = vrcp.pop %v1076
    %v1099 = vrcp.pop %v1078
    %v1100 = vrcp.pop %v1080
    %v1101 = vrcp.pop %v1082
    %v1102 = vrcp.pop %v1084
    %v1103 = vrcp.pop %v1086
    %v1104 = vrcp.pop %v1088
    %v1105 = vmul.f32 %v1026, %v1089
    %v1106 = vmul.f32 %v1028, %v1090
    %v1107 = vmul.f32 %v1030, %v1091
    %v1108 = vmul.f32 %v1032, %v1092
    %v1109 = vmul.f32 %v1034, %v1093
    %v1110 = vmul.f32 %v1036, %v1094
    %v1111 = vmul.f32 %v1038, %v1095
    %v1112 = vmul.f32 %v1040, %v1096
    %v1113 = vmul.f32 %v1042, %v1097
    %v1114 = vmul.f32 %v1044, %v1098
    %v1115 = vmul.f32 %v1046, %v1099
    %v1116 = vmul.f32 %v1048, %v1100
    %v1117 = vmul.f32 %v1050, %v1101
    %v1118 = vmul.f32 %v1052, %v1102
    %v1119 = vmul.f32 %v1054, %v1103
    %v1120 = vmul.f32 %v1056, %v1104
    %v1121 = vmax.f32 %v928, 0.0
    %v1122 = vmax.f32 %v933, 0.0
    %v1123 = vmax.f32 %v938, 0.0
    %v1124 = vmax.f32 %v943, 0.0
    %v1125 = vmax.f32 %v948, 0.0
    %v1126 = vmax.f32 %v953, 0.0
    %v1127 = vmax.f32 %v958, 0.0
    %v1128 = vmax.f32 %v963, 0.0
    %v1129 = vmax.f32 %v968, 0.0
    %v1130 = vmax.f32 %v973, 0.0
    %v1131 = vmax.f32 %v978, 0.0
    %v1132 = vmax.f32 %v983, 0.0
    %v1133 = vmax.f32 %v988, 0.0
    %v1134 = vmax.f32 %v993, 0.0
    %v1135 = vmax.f32 %v998, 0.0
    %v1136 = vmax.f32 %v1003, 0.0
    %v1137 = vld [vmem:[%s9] sm:$0x1]
    %v1139 = vlaneseq
    %v1140 = vshrl.u32 %v1139, 7
    %v1141 = vsub.s32 0, %v1140
    %v1142 = vrot.slane %v1137, %v1141
    %v1144 = vmul.f32 %v1121, %v1142
    %v1145 = vmul.f32 %v1122, %v1142
    %v1146 = vmul.f32 %v1123, %v1142
    %v1147 = vmul.f32 %v1124, %v1142
    %v1148 = vmul.f32 %v1125, %v1142
    %v1149 = vmul.f32 %v1126, %v1142
    %v1150 = vmul.f32 %v1127, %v1142
    %v1151 = vmul.f32 %v1128, %v1142
    %v1152 = vmul.f32 %v1129, %v1142
    %v1153 = vmul.f32 %v1130, %v1142
    %v1154 = vmul.f32 %v1131, %v1142
    %v1155 = vmul.f32 %v1132, %v1142
    %v1156 = vmul.f32 %v1133, %v1142
    %v1157 = vmul.f32 %v1134, %v1142
    %v1158 = vmul.f32 %v1135, %v1142
    %v1159 = vmul.f32 %v1136, %v1142
    %1160 = vadd.xlane.f32.xlu0 %v1144
    %v1161 = vpop.xlane.xlu0 %1160
    %1162 = vadd.xlane.f32.xlu0 %v1145
    %v1163 = vpop.xlane.xlu0 %1162
    %1164 = vadd.xlane.f32.xlu0 %v1146
    %v1165 = vpop.xlane.xlu0 %1164
    %1166 = vadd.xlane.f32.xlu0 %v1147
    %v1167 = vpop.xlane.xlu0 %1166
    %1168 = vadd.xlane.f32.xlu0 %v1148
    %v1169 = vpop.xlane.xlu0 %1168
    %1170 = vadd.xlane.f32.xlu0 %v1149
    %v1171 = vpop.xlane.xlu0 %1170
    %1172 = vadd.xlane.f32.xlu0 %v1150
    %v1173 = vpop.xlane.xlu0 %1172
    %1174 = vadd.xlane.f32.xlu0 %v1151
    %v1175 = vpop.xlane.xlu0 %1174
    %1176 = vadd.xlane.f32.xlu0 %v1152
    %v1177 = vpop.xlane.xlu0 %1176
    %1178 = vadd.xlane.f32.xlu0 %v1153
    %v1179 = vpop.xlane.xlu0 %1178
    %1180 = vadd.xlane.f32.xlu0 %v1154
    %v1181 = vpop.xlane.xlu0 %1180
    %1182 = vadd.xlane.f32.xlu0 %v1155
    %v1183 = vpop.xlane.xlu0 %1182
    %1184 = vadd.xlane.f32.xlu0 %v1156
    %v1185 = vpop.xlane.xlu0 %1184
    %1186 = vadd.xlane.f32.xlu0 %v1157
    %v1187 = vpop.xlane.xlu0 %1186
    %1188 = vadd.xlane.f32.xlu0 %v1158
    %v1189 = vpop.xlane.xlu0 %1188
    %1190 = vadd.xlane.f32.xlu0 %v1159
    %v1191 = vpop.xlane.xlu0 %1190
    %v1192 = vld [vmem:[#allocation2] sm:$0x1]
    %v1194 = vlaneseq
    %v1195 = vshrl.u32 %v1194, 7
    %v1196 = vsub.s32 0, %v1195
    %v1197 = vrot.slane %v1192, %v1196
    %v1199 = vadd.f32 %v1161, %v1197
    %v1200 = vadd.f32 %v1163, %v1197
    %v1201 = vadd.f32 %v1165, %v1197
    %v1202 = vadd.f32 %v1167, %v1197
    %v1203 = vadd.f32 %v1169, %v1197
    %v1204 = vadd.f32 %v1171, %v1197
    %v1205 = vadd.f32 %v1173, %v1197
    %v1206 = vadd.f32 %v1175, %v1197
    %v1207 = vadd.f32 %v1177, %v1197
    %v1208 = vadd.f32 %v1179, %v1197
    %v1209 = vadd.f32 %v1181, %v1197
    %v1210 = vadd.f32 %v1183, %v1197
    %v1211 = vadd.f32 %v1185, %v1197
    %v1212 = vadd.f32 %v1187, %v1197
    %v1213 = vadd.f32 %v1189, %v1197
    %v1214 = vadd.f32 %v1191, %v1197
    %vm1215 = vcmp.eq.s32.totalorder %v1007, 8
    %1217 = vset.pattern.permute.xlu0 0
    %1218 = vperm.xlu0 %1217, %v1199
    %v1219 = vpop.permute.xlu0 %1218
    %1222 = vset.pattern.permute.xlu0 0
    %1223 = vperm.xlu0 %1222, %v1200
    %v1224 = vpop.permute.xlu0 %1223
    %1227 = vset.pattern.permute.xlu0 0
    %1228 = vperm.xlu0 %1227, %v1201
    %v1229 = vpop.permute.xlu0 %1228
    %1232 = vset.pattern.permute.xlu0 0
    %1233 = vperm.xlu0 %1232, %v1202
    %v1234 = vpop.permute.xlu0 %1233
    %1237 = vset.pattern.permute.xlu0 0
    %1238 = vperm.xlu0 %1237, %v1203
    %v1239 = vpop.permute.xlu0 %1238
    %1242 = vset.pattern.permute.xlu0 0
    %1243 = vperm.xlu0 %1242, %v1204
    %v1244 = vpop.permute.xlu0 %1243
    %1247 = vset.pattern.permute.xlu0 0
    %1248 = vperm.xlu0 %1247, %v1205
    %v1249 = vpop.permute.xlu0 %1248
    %1252 = vset.pattern.permute.xlu0 0
    %1253 = vperm.xlu0 %1252, %v1206
    %v1254 = vpop.permute.xlu0 %1253
    %1257 = vset.pattern.permute.xlu0 0
    %1258 = vperm.xlu0 %1257, %v1207
    %v1259 = vpop.permute.xlu0 %1258
    %1262 = vset.pattern.permute.xlu0 0
    %1263 = vperm.xlu0 %1262, %v1208
    %v1264 = vpop.permute.xlu0 %1263
    %1267 = vset.pattern.permute.xlu0 0
    %1268 = vperm.xlu0 %1267, %v1209
    %v1269 = vpop.permute.xlu0 %1268
    %1272 = vset.pattern.permute.xlu0 0
    %1273 = vperm.xlu0 %1272, %v1210
    %v1274 = vpop.permute.xlu0 %1273
    %1277 = vset.pattern.permute.xlu0 0
    %1278 = vperm.xlu0 %1277, %v1211
    %v1279 = vpop.permute.xlu0 %1278
    %1282 = vset.pattern.permute.xlu0 0
    %1283 = vperm.xlu0 %1282, %v1212
    %v1284 = vpop.permute.xlu0 %1283
    %1287 = vset.pattern.permute.xlu0 0
    %1288 = vperm.xlu0 %1287, %v1213
    %v1289 = vpop.permute.xlu0 %1288
    %1292 = vset.pattern.permute.xlu0 0
    %1293 = vperm.xlu0 %1292, %v1214
    %v1294 = vpop.permute.xlu0 %1293
    %v1296 = vsel %vm1215, %v1219, 0.0
    %v1297 = vsel %vm1215, %v1224, 0.0
    %v1298 = vsel %vm1215, %v1229, 0.0
    %v1299 = vsel %vm1215, %v1234, 0.0
    %v1300 = vsel %vm1215, %v1239, 0.0
    %v1301 = vsel %vm1215, %v1244, 0.0
    %v1302 = vsel %vm1215, %v1249, 0.0
    %v1303 = vsel %vm1215, %v1254, 0.0
    %v1304 = vsel %vm1215, %v1259, 0.0
    %v1305 = vsel %vm1215, %v1264, 0.0
    %v1306 = vsel %vm1215, %v1269, 0.0
    %v1307 = vsel %vm1215, %v1274, 0.0
    %v1308 = vsel %vm1215, %v1279, 0.0
    %v1309 = vsel %vm1215, %v1284, 0.0
    %v1310 = vsel %vm1215, %v1289, 0.0
    %v1311 = vsel %vm1215, %v1294, 0.0
    %v1312 = vadd.f32 %v1105, %v1296
    %v1313 = vadd.f32 %v1106, %v1297
    %v1314 = vadd.f32 %v1107, %v1298
    %v1315 = vadd.f32 %v1108, %v1299
    %v1316 = vadd.f32 %v1109, %v1300
    %v1317 = vadd.f32 %v1110, %v1301
    %v1318 = vadd.f32 %v1111, %v1302
    %v1319 = vadd.f32 %v1112, %v1303
    %v1320 = vadd.f32 %v1113, %v1304
    %v1321 = vadd.f32 %v1114, %v1305
    %v1322 = vadd.f32 %v1115, %v1306
    %v1323 = vadd.f32 %v1116, %v1307
    %v1324 = vadd.f32 %v1117, %v1308
    %v1325 = vadd.f32 %v1118, %v1309
    %v1326 = vadd.f32 %v1119, %v1310
    %v1327 = vadd.f32 %v1120, %v1311
    %1328 = vst [vmem:[%s11] sm:$0xff] %v1312
    %1329 = vst [vmem:[%s11 + $0x8] sm:$0xff] %v1313
    %1330 = vst [vmem:[%s11 + $0x10] sm:$0xff] %v1314
    %1331 = vst [vmem:[%s11 + $0x18] sm:$0xff] %v1315
    %1332 = vst [vmem:[%s11 + $0x20] sm:$0xff] %v1316
    %1333 = vst [vmem:[%s11 + $0x28] sm:$0xff] %v1317
    %1334 = vst [vmem:[%s11 + $0x30] sm:$0xff] %v1318
    %1335 = vst [vmem:[%s11 + $0x38] sm:$0xff] %v1319
    %1336 = vst [vmem:[%s11 + $0x40] sm:$0xff] %v1320
    %1337 = vst [vmem:[%s11 + $0x48] sm:$0xff] %v1321
    %1338 = vst [vmem:[%s11 + $0x50] sm:$0xff] %v1322
    %1339 = vst [vmem:[%s11 + $0x58] sm:$0xff] %v1323
    %1340 = vst [vmem:[%s11 + $0x60] sm:$0xff] %v1324
    %1341 = vst [vmem:[%s11 + $0x68] sm:$0xff] %v1325
    %1342 = vst [vmem:[%s11 + $0x70] sm:$0xff] %v1326
    %1343 = vst [vmem:[%s11 + $0x78] sm:$0xff] %v1327
    // Predicated region
    $region58: #{alphazero_forward.1} parent=1 // pred_check
      _
    $region59: #{alphazero_forward.1} parent=1 // pred_check_branch
      %1345 = sbr.rel (0) target = $region61
    $region60: #{alphazero_forward.1} parent=1 // pred_region
      _
    $region61: #{alphazero_forward.1} parent=1 // pred_fallthru
      _
    // Predicated region
    $region62: #{alphazero_forward.1} parent=1 // pred_check
      _
    $region63: #{alphazero_forward.1} parent=1 // pred_check_branch
      %1347 = sbr.rel (0) target = $region65
    $region64: #{alphazero_forward.1} parent=1 // pred_region
      _
    $region65: #{alphazero_forward.1} parent=1 // pred_fallthru
      _
    %1348 = vsyncpa [#allocation4], 1
    %1349 = vsyncpa [#allocation6], 1

</llo_original>
